<compile_context>
chip_gen: v6e
topology: v6e:2x2x1
jax: 0.10.0
libtpu: 0.0.40
codegen_flags: <defaults>
</compile_context>

<pallas_src>
import functools
import math

import numpy as np

import jax
import jax.numpy as jnp
from jax import lax
from jax.experimental import pallas as pl
from jax.experimental.pallas import tpu as pltpu


def data_embedding_kernel(x_ref, halo_ref, w_ref, pe_ref, out_ref, xs_ref,
                          *, seq_len, tile_l):
    # x_ref:    (1, TL, c_in)       current sequence tile of x
    # halo_ref: (1, 1, 2, c_in)     [x[l*TL - 1], x[(l+1)*TL]]  (index-clamped)
    # w_ref:    (3, c_in, d_model)  conv taps k = 0, 1, 2
    # pe_ref:   (TL, d_model)       positional-embedding tile (resident over b)
    # out_ref:  (1, TL, d_model)
    # xs_ref:   (TL + 16, c_in)     VMEM scratch: tile + 1-row halo each side
    l = pl.program_id(0)
    x_cur = x_ref[0]                                   # (TL, c_in)
    halo = halo_ref[0, 0]                              # (2, c_in)

    # Stage [halo_prev | tile | halo_next] so the shifted views are plain
    # (offset) reads.  Bulk store is sublane-aligned (offset 8).
    xs_ref[7:8, :] = halo[0:1, :]
    xs_ref[8:tile_l + 8, :] = x_cur
    xs_ref[tile_l + 8:tile_l + 9, :] = halo[1:2, :]

    x_prev = xs_ref[7:tile_l + 7, :]                   # x[t-1]
    x_next = xs_ref[9:tile_l + 9, :]                   # x[t+1]

    # Replicate ("edge") boundary at the end of the sequence.  Needed when the
    # last tile is ragged: the in-tile row after position L-1 holds garbage
    # (masked boundary block), so clamp x[t+1] -> x[t] at t == L-1.  The start
    # boundary is already correct because tile 0's "prev" halo row is x[0].
    row_global = l * tile_l + lax.broadcasted_iota(
        jnp.int32, (tile_l, x_cur.shape[-1]), 0)
    x_next = jnp.where(row_global == seq_len - 1, x_cur, x_next)

    acc = jnp.dot(x_prev, w_ref[0], preferred_element_type=jnp.float32,
                  precision=lax.Precision.HIGHEST)
    acc = acc + jnp.dot(x_cur, w_ref[1], preferred_element_type=jnp.float32,
                        precision=lax.Precision.HIGHEST)
    acc = acc + jnp.dot(x_next, w_ref[2], preferred_element_type=jnp.float32,
                        precision=lax.Precision.HIGHEST)

    out_ref[0] = (pe_ref[...].astype(jnp.float32) + acc).astype(out_ref.dtype)


def _choose_tile_l(L, tl_max=1024):
    # Balanced sequence tile: n = ceil(L / tl_max) tiles, each of length
    # ceil(L / n) rounded up to the sublane multiple (8).  Keeps the ragged
    # tail tiny while allowing big DMAs (>= ~85% of HBM roofline territory).
    n = -(-L // tl_max)
    tl = -(-L // n)
    return -(-tl // 8) * 8


def data_embedding(x, conv_weight, pe_full, out_dtype=jnp.float32):
    """
    x:           (B, L, c_in)        float32
    conv_weight: (d_model, c_in, 3)  PyTorch Conv1d weight layout
    pe_full:     (max_len, d_model)  precomputed sinusoidal table (max_len >= L)
    returns:     (B, L, d_model) in out_dtype
    """
    B, L, c_in = x.shape
    d_model = conv_weight.shape[0]
    assert pe_full.shape[0] >= L and pe_full.shape[1] == d_model

    x = x.astype(jnp.float32)
    # Conv1d weight (d_model, c_in, 3) -> per-tap (3, c_in, d_model)
    w = jnp.transpose(conv_weight, (2, 1, 0)).astype(jnp.float32)
    pe_full = pe_full.astype(jnp.float32)

    TL = _choose_tile_l(L)
    n_lt = -(-L // TL)

    # One-row halos for every sequence tile: [x[l*TL - 1], x[(l+1)*TL]],
    # clamped into range (this also implements the replicate boundary at t=0).
    starts = np.arange(n_lt) * TL
    prev_idx = np.maximum(starts - 1, 0)
    next_idx = np.minimum(starts + TL, L - 1)
    halo = jnp.stack([x[:, prev_idx, :], x[:, next_idx, :]], axis=2)  # (B, n_lt, 2, c_in)

    kernel = functools.partial(data_embedding_kernel, seq_len=L, tile_l=TL)

    flops = 2 * B * L * 3 * c_in * d_model
    bytes_accessed = 4 * (B * L * c_in + B * n_lt * 2 * c_in
                          + 3 * c_in * d_model
                          + n_lt * TL * d_model          # PE read (once per L-tile)
                          + B * L * d_model)             # output write

    out = pl.pallas_call(
        kernel,
        out_shape=jax.ShapeDtypeStruct((B, L, d_model), out_dtype),
        grid_spec=pltpu.PrefetchScalarGridSpec(
            num_scalar_prefetch=0,
            # Sequence tiles outer, batch innermost: pe / w block indices are
            # constant across consecutive steps -> no per-batch re-fetch.
            grid=(n_lt, B),
            in_specs=[
                pl.BlockSpec((1, TL, c_in), lambda l, b: (b, l, 0)),
                pl.BlockSpec((1, 1, 2, c_in), lambda l, b: (b, l, 0, 0)),
                pl.BlockSpec((3, c_in, d_model), lambda l, b: (0, 0, 0)),
                pl.BlockSpec((TL, d_model), lambda l, b: (l, 0)),
            ],
            out_specs=pl.BlockSpec((1, TL, d_model), lambda l, b: (b, l, 0)),
            scratch_shapes=[pltpu.VMEM((TL + 16, c_in), jnp.float32)],
        ),
        compiler_params=pltpu.CompilerParams(
            dimension_semantics=("parallel", "parallel"),
            vmem_limit_bytes=48 * 1024 * 1024,
        ),
        cost_estimate=pl.CostEstimate(flops=flops, transcendentals=0,
                                      bytes_accessed=bytes_accessed),
    )(x, halo, w, pe_full)
    return out


def make_positional_embedding(max_len, d_model):
    position = jnp.arange(max_len, dtype=jnp.float32)[:, None]          # (max_len, 1)
    div_term = jnp.exp(jnp.arange(0, d_model, 2, dtype=jnp.float32)
                       * (-(math.log(10000.0) / d_model)))              # (d_model/2,)
    pe = jnp.zeros((max_len, d_model), dtype=jnp.float32)
    pe = pe.at[:, 0::2].set(jnp.sin(position * div_term))
    pe = pe.at[:, 1::2].set(jnp.cos(position * div_term))
    return pe


def make_conv_weight(key, c_in, d_model):
    # kaiming_normal_(mode='fan_in', nonlinearity='leaky_relu') on
    # weight of shape (d_model, c_in, 3): fan_in = c_in * 3,
    # gain = sqrt(2 / (1 + 0.01^2)), std = gain / sqrt(fan_in)
    fan_in = c_in * 3
    gain = math.sqrt(2.0 / (1.0 + 0.01 ** 2))
    std = gain / math.sqrt(fan_in)
    return std * jax.random.normal(key, (d_model, c_in, 3), dtype=jnp.float32)


def reference_data_embedding(x, conv_weight, pe_full):
    """Plain-JAX reference reproducing the PyTorch semantics (eval mode)."""
    B, L, c_in = x.shape
    x_pad = jnp.concatenate([x[:, :1, :], x, x[:, -1:, :]], axis=1)  # replicate pad
    w = jnp.transpose(conv_weight, (2, 1, 0))  # (3, c_in, d_model)
    out = pe_full[:L][None, :, :]
    for k in range(3):
        out = out + jnp.einsum("blc,cd->bld", x_pad[:, k:k + L, :], w[k],
                               precision=lax.Precision.HIGHEST)
    return out


if __name__ == "__main__":
    B, L, c_in, d_model, max_len = 2, 8, 4, 32, 64

    key = jax.random.PRNGKey(0)
    kx, kw = jax.random.split(key)
    x = jax.random.normal(kx, (B, L, c_in), dtype=jnp.float32)
    conv_weight = make_conv_weight(kw, c_in, d_model)
    pe_full = make_positional_embedding(max_len, d_model)

    out = data_embedding(x, conv_weight, pe_full)
    out = jax.block_until_ready(out)

    ref = reference_data_embedding(x, conv_weight, pe_full)
    assert out.shape == (B, L, d_model)
    assert jnp.allclose(out, ref, atol=1e-5, rtol=1e-5)

    print("KERNEL_OK")
</pallas_src>

<mosaic_0001>
module attributes {stable_mosaic.version = 11 : i64} {
  func.func @data_embedding_kernel(%arg0: i32, %arg1: i32, %arg2: memref<1x8x4xf32, #tpu.memory_space<vmem>>, %arg3: memref<1x1x2x4xf32, #tpu.memory_space<vmem>>, %arg4: memref<3x4x32xf32, #tpu.memory_space<vmem>>, %arg5: memref<8x32xf32, #tpu.memory_space<vmem>>, %arg6: memref<1x8x32xf32, #tpu.memory_space<vmem>>, %arg7: memref<24x4xf32, #tpu.memory_space<vmem>>) attributes {dimension_semantics = [#tpu.dimension_semantics<parallel>, #tpu.dimension_semantics<parallel>], iteration_bounds = array<i64: 1, 2>, scalar_prefetch = 0 : i64, scratch_operands = 1 : i64, tpu.core_type = #tpu.core_type<tc>, window_params = [{transform_indices = @transform_0, window_bounds = array<i64: 1, 8, 4>}, {transform_indices = @transform_1, window_bounds = array<i64: 1, 1, 2, 4>}, {pipeline_mode = #tpu.pipeline_mode<synchronous>, transform_indices = @transform_2, window_bounds = array<i64: 3, 4, 32>}, {transform_indices = @transform_3, window_bounds = array<i64: 8, 32>}, {transform_indices = @transform_4, window_bounds = array<i64: 1, 8, 32>}]} {
    %c0 = arith.constant 0 : index
    %c0_0 = arith.constant 0 : index
    %c0_1 = arith.constant 0 : index
    %0 = vector.load %arg2[%c0, %c0_0, %c0_1] : memref<1x8x4xf32, #tpu.memory_space<vmem>>, vector<1x8x4xf32>
    %1 = vector.shape_cast %0 : vector<1x8x4xf32> to vector<8x4xf32>
    %c0_2 = arith.constant 0 : index
    %c0_3 = arith.constant 0 : index
    %c0_4 = arith.constant 0 : index
    %c0_5 = arith.constant 0 : index
    %2 = vector.load %arg3[%c0_2, %c0_3, %c0_4, %c0_5] : memref<1x1x2x4xf32, #tpu.memory_space<vmem>>, vector<1x1x2x4xf32>
    %3 = vector.shape_cast %2 : vector<1x1x2x4xf32> to vector<2x4xf32>
    %4 = vector.extract_strided_slice %3 {offsets = [0, 0], sizes = [1, 4], strides = [1, 1]} : vector<2x4xf32> to vector<1x4xf32>
    %c7 = arith.constant 7 : index
    %c0_6 = arith.constant 0 : index
    %5 = vector.load %arg7[%c7, %c0_6] : memref<24x4xf32, #tpu.memory_space<vmem>>, vector<1x4xf32>
    tpu.vector_store %arg7[%c7, %c0_6], %4 {strides = array<i32>} : memref<24x4xf32, #tpu.memory_space<vmem>>, vector<1x4xf32>,
    %c8 = arith.constant 8 : index
    %c0_7 = arith.constant 0 : index
    %6 = vector.load %arg7[%c8, %c0_7] : memref<24x4xf32, #tpu.memory_space<vmem>>, vector<8x4xf32>
    tpu.vector_store %arg7[%c8, %c0_7], %1 {strides = array<i32>} : memref<24x4xf32, #tpu.memory_space<vmem>>, vector<8x4xf32>,
    %7 = vector.extract_strided_slice %3 {offsets = [1, 0], sizes = [1, 4], strides = [1, 1]} : vector<2x4xf32> to vector<1x4xf32>
    %c16 = arith.constant 16 : index
    %c0_8 = arith.constant 0 : index
    %8 = vector.load %arg7[%c16, %c0_8] : memref<24x4xf32, #tpu.memory_space<vmem>>, vector<1x4xf32>
    tpu.vector_store %arg7[%c16, %c0_8], %7 {strides = array<i32>} : memref<24x4xf32, #tpu.memory_space<vmem>>, vector<1x4xf32>,
    %c7_9 = arith.constant 7 : index
    %c0_10 = arith.constant 0 : index
    %9 = vector.load %arg7[%c7_9, %c0_10] : memref<24x4xf32, #tpu.memory_space<vmem>>, vector<8x4xf32>
    %c9 = arith.constant 9 : index
    %c0_11 = arith.constant 0 : index
    %10 = vector.load %arg7[%c9, %c0_11] : memref<24x4xf32, #tpu.memory_space<vmem>>, vector<8x4xf32>
    %c8_i32 = arith.constant 8 : i32
    %11 = arith.muli %arg0, %c8_i32 : i32
    %12 = tpu.iota {dimensions = array<i32: 0>} : vector<8x4xi32>
    %13 = vector.broadcast %11 : i32 to vector<8x4xi32>
    %14 = arith.addi %13, %12 : vector<8x4xi32>
    %c7_i32 = arith.constant 7 : i32
    %15 = vector.broadcast %c7_i32 : i32 to vector<8x4xi32>
    %16 = arith.cmpi eq, %14, %15 : vector<8x4xi32>
    %17 = arith.select %16, %1, %10 : vector<8x4xi1>, vector<8x4xf32>
    %c0_12 = arith.constant 0 : index
    %c0_13 = arith.constant 0 : index
    %c0_14 = arith.constant 0 : index
    %18 = vector.load %arg4[%c0_12, %c0_13, %c0_14] : memref<3x4x32xf32, #tpu.memory_space<vmem>>, vector<1x4x32xf32>
    %19 = vector.shape_cast %18 : vector<1x4x32xf32> to vector<4x32xf32>
    %cst = arith.constant dense<0.000000e+00> : vector<8x32xf32>
    %20 = tpu.matmul %9, %19, %cst {dimension_numbers = #tpu.dot_dimension_numbers<[1], [0], [0], [1], [0, 0, 1, 1], [], []>, precision = #tpu.contract_precision<fp32>} : vector<8x4xf32>, vector<4x32xf32>, vector<8x32xf32> -> vector<8x32xf32>
    %c1 = arith.constant 1 : index
    %c0_15 = arith.constant 0 : index
    %c0_16 = arith.constant 0 : index
    %21 = vector.load %arg4[%c1, %c0_15, %c0_16] : memref<3x4x32xf32, #tpu.memory_space<vmem>>, vector<1x4x32xf32>
    %22 = vector.shape_cast %21 : vector<1x4x32xf32> to vector<4x32xf32>
    %cst_17 = arith.constant dense<0.000000e+00> : vector<8x32xf32>
    %23 = tpu.matmul %1, %22, %cst_17 {dimension_numbers = #tpu.dot_dimension_numbers<[1], [0], [0], [1], [0, 0, 1, 1], [], []>, precision = #tpu.contract_precision<fp32>} : vector<8x4xf32>, vector<4x32xf32>, vector<8x32xf32> -> vector<8x32xf32>
    %24 = arith.addf %20, %23 : vector<8x32xf32>
    %c2 = arith.constant 2 : index
    %c0_18 = arith.constant 0 : index
    %c0_19 = arith.constant 0 : index
    %25 = vector.load %arg4[%c2, %c0_18, %c0_19] : memref<3x4x32xf32, #tpu.memory_space<vmem>>, vector<1x4x32xf32>
    %26 = vector.shape_cast %25 : vector<1x4x32xf32> to vector<4x32xf32>
    %cst_20 = arith.constant dense<0.000000e+00> : vector<8x32xf32>
    %27 = tpu.matmul %17, %26, %cst_20 {dimension_numbers = #tpu.dot_dimension_numbers<[1], [0], [0], [1], [0, 0, 1, 1], [], []>, precision = #tpu.contract_precision<fp32>} : vector<8x4xf32>, vector<4x32xf32>, vector<8x32xf32> -> vector<8x32xf32>
    %28 = arith.addf %24, %27 : vector<8x32xf32>
    %c0_21 = arith.constant 0 : index
    %c0_22 = arith.constant 0 : index
    %29 = vector.load %arg5[%c0_21, %c0_22] : memref<8x32xf32, #tpu.memory_space<vmem>>, vector<8x32xf32>
    %30 = arith.addf %29, %28 : vector<8x32xf32>
    %c0_23 = arith.constant 0 : index
    %c0_24 = arith.constant 0 : index
    %c0_25 = arith.constant 0 : index
    %31 = vector.load %arg6[%c0_23, %c0_24, %c0_25] : memref<1x8x32xf32, #tpu.memory_space<vmem>>, vector<1x8x32xf32>
    %32 = vector.shape_cast %31 : vector<1x8x32xf32> to vector<8x32xf32>
    %33 = vector.shape_cast %30 : vector<8x32xf32> to vector<1x8x32xf32>
    tpu.vector_store %arg6[%c0_23, %c0_24, %c0_25], %33 {strides = array<i32>} : memref<1x8x32xf32, #tpu.memory_space<vmem>>, vector<1x8x32xf32>,
    return
  }
  func.func @transform_0(%arg0: i32, %arg1: i32) -> (i32, i32, i32) {
    %c0_i32 = arith.constant 0 : i32
    %c0_i32_0 = arith.constant 0 : i32
    return %arg1, %arg0, %c0_i32 : i32, i32, i32
  }
  func.func @transform_1(%arg0: i32, %arg1: i32) -> (i32, i32, i32, i32) {
    %c0_i32 = arith.constant 0 : i32
    %c0_i32_0 = arith.constant 0 : i32
    %c0_i32_1 = arith.constant 0 : i32
    return %arg1, %arg0, %c0_i32, %c0_i32_0 : i32, i32, i32, i32
  }
  func.func @transform_2(%arg0: i32, %arg1: i32) -> (i32, i32, i32) {
    %c0_i32 = arith.constant 0 : i32
    %c0_i32_0 = arith.constant 0 : i32
    %c0_i32_1 = arith.constant 0 : i32
    %c0_i32_2 = arith.constant 0 : i32
    return %c0_i32, %c0_i32_0, %c0_i32_1 : i32, i32, i32
  }
  func.func @transform_3(%arg0: i32, %arg1: i32) -> (i32, i32) {
    %c0_i32 = arith.constant 0 : i32
    %c0_i32_0 = arith.constant 0 : i32
    return %arg0, %c0_i32 : i32, i32
  }
  func.func @transform_4(%arg0: i32, %arg1: i32) -> (i32, i32, i32) {
    %c0_i32 = arith.constant 0 : i32
    %c0_i32_0 = arith.constant 0 : i32
    return %arg1, %arg0, %c0_i32 : i32, i32, i32
  }
}

</mosaic_0001>

<llo_original>
// kernel: tpu_custom_call.1
$region0: #{tpu_custom_call.1}
  #allocation0 [shape = 'u32[]', space=smem, size = 0x4, offset = 0x4, fixed_abs, tag = 'smem constant byte address 0x4 - core index']
  #allocation1 [shape = 'u32[144,128]{1,0:T(1,128)}', space=vmem, size = 0x12000, scoped, tag = 'internal scratch']
  #allocation2 [shape = 'f32[24,4]{1,0:T(8,128)}', space=vmem, size = 0x3000, scoped, tag = 'scratch operand']
  %s0 = inlined_call_operand.vmem [shape: f32[2,8,4], index: 0, kind: input, shape index: {}]
  %s1 = inlined_call_operand.vmem [shape: f32[2,1,2,4], index: 1, kind: input, shape index: {}]
  %s2 = inlined_call_operand.vmem [shape: f32[3,4,32], index: 2, kind: input, shape index: {}]
  %s3 = inlined_call_operand.vmem [shape: f32[64,32], index: 3, kind: input, shape index: {}]
  %s4 = inlined_call_operand.hbm [shape: f32[2,8,32], index: 4, kind: output, shape index: {}]
  %s5 = sld [smem:[#allocation0]]
  $region49: #{tpu_custom_call.1} parent=0
    _
  %s7 = ssub.s32 1, %s5
  %s8 = scalar_select 0, %s7, %s5
  $region1: #{tpu_custom_call.1} parent=0
    #allocation3 [shape = 'u8[8192]{0}', space=vmem, size = 0x2000, scoped, tag = 'output window, operand 0']
    #allocation4 [shape = 's32[2]{0}', space=sflag, size = 0x8, scoped, tag = 'scoped memory for tpu_custom_call.1']
    %9 = vsyncpa [#allocation4], 0
    %s10 = scalar_lea.sflag [#allocation4], 1
    %11 = vsyncpa %s10, 0
    loop: start=0, step=1, limit=4
    $region2: #{tpu_custom_call.1} parent=1 // loop_pre_header
      _
    $region3: #{tpu_custom_call.1} parent=1 // loop_header
      %s13 = sphi 0, %s17
      %p14 = scmp.ge.s32.totalorder %s13, 4
      %s20 = sphi 0, %s32
      %s21 = sphi 0, %s28
      %s22 = sphi 0, %s20
      %s23 = sphi 0, %s21
      %s24 = sphi 0, %s22
      %s25 = sphi 0, %s23
      %s37 = sphi 0, %s39
      %s40 = sphi 0, %s37
      %s41 = sphi 0, %s40
      %s57 = sphi 0, %s41
      %s65 = sphi 0, %s67
      %s68 = sphi 0, %s65
      %s69 = sphi 0, %s68
      %s85 = sphi 0, %s69
      %s89 = sphi 0, %s89
      %s91 = sphi 0, %s89
      %s92 = sphi 0, %s91
      %s106 = sphi 0, %s92
      %s112 = sphi 0, %s114
      %s115 = sphi 0, %s112
      %s116 = sphi 0, %s115
      %s132 = sphi 0, %s116
      %s140 = sphi 0, %s142
      %s143 = sphi 0, %s140
      %s144 = sphi 0, %s143
      %s160 = sphi 0, %s144
    $region4: #{tpu_custom_call.1} parent=1 // loop_header_branch
      %16 = sbr.rel (%p14) target = $region8
    $region5: #{tpu_custom_call.1} parent=1 // loop_body
      %s18 = ssub.s32 %s13, 1
      %s19 = ssub.s32 %s13, 2
      %s26 = sadd.s32 1, %s21
      %p27 = scmp.ge.s32.totalorder %s26, 2
      %s28 = scalar_select %p27, 0, %s26
      %s29 = sadd.s32 1, %s20
      %s30 = scalar_select %p27, %s29, %s20
      %p31 = scmp.ge.s32.totalorder %s30, 1
      %s32 = scalar_select %p31, 0, %s30
      %s33 = ssub.s32 %s21, %s28
      %s34 = ssub.s32 %s20, %s32
      %s35 = sor.u32 %s33, %s34
      %p36 = scmp.eq.s32.totalorder %s35, 0
      %s38 = sadd.s32 %s37, 1
      %s39 = scalar_select %p36, %s37, %s38
      %p42 = pneg %p36
      %p43 = scmp.eq.s32.totalorder %s13, 1
      %p44 = por %p42, %p43
      %p45 = scmp.ne.s32.totalorder %s37, %s40
      %p46 = scmp.eq.s32.totalorder %s13, 0
      %p47 = por %p45, %p46
      %p48 = scmp.ne.s32.totalorder %s37, %s40
      %p49 = scmp.eq.s32.totalorder %s18, 1
      %p50 = por %p48, %p49
      %p51 = scmp.ne.s32.totalorder %s40, %s41
      %p52 = scmp.eq.s32.totalorder %s18, 0
      %p53 = por %p51, %p52
      %p54 = scmp.ne.s32.totalorder %s40, %s41
      %p55 = scmp.eq.s32.totalorder %s19, 1
      %p56 = por %p54, %p55
      %p58 = scmp.ne.s32.totalorder %s41, %s57
      %p59 = scmp.eq.s32.totalorder %s19, 0
      %p60 = por %p58, %p59
      %s61 = ssub.s32 %s21, %s28
      %s62 = ssub.s32 %s20, %s32
      %s63 = sor.u32 %s61, %s62
      %p64 = scmp.eq.s32.totalorder %s63, 0
      %s66 = sadd.s32 %s65, 1
      %s67 = scalar_select %p64, %s65, %s66
      %p70 = pneg %p64
      %p71 = scmp.eq.s32.totalorder %s13, 1
      %p72 = por %p70, %p71
      %p73 = scmp.ne.s32.totalorder %s65, %s68
      %p74 = scmp.eq.s32.totalorder %s13, 0
      %p75 = por %p73, %p74
      %p76 = scmp.ne.s32.totalorder %s65, %s68
      %p77 = scmp.eq.s32.totalorder %s18, 1
      %p78 = por %p76, %p77
      %p79 = scmp.ne.s32.totalorder %s68, %s69
      %p80 = scmp.eq.s32.totalorder %s18, 0
      %p81 = por %p79, %p80
      %p82 = scmp.ne.s32.totalorder %s68, %s69
      %p83 = scmp.eq.s32.totalorder %s19, 1
      %p84 = por %p82, %p83
      %p86 = scmp.ne.s32.totalorder %s69, %s85
      %p87 = scmp.eq.s32.totalorder %s19, 0
      %p88 = por %p86, %p87
      %s90 = sadd.s32 %s89, 1
      %p93 = scmp.eq.s32.totalorder %s13, 1
      %p94 = scmp.ne.s32.totalorder %s89, %s91
      %p95 = scmp.eq.s32.totalorder %s13, 0
      %p96 = por %p94, %p95
      %p97 = scmp.ne.s32.totalorder %s89, %s91
      %p98 = scmp.eq.s32.totalorder %s18, 1
      %p99 = por %p97, %p98
      %p100 = scmp.ne.s32.totalorder %s91, %s92
      %p101 = scmp.eq.s32.totalorder %s18, 0
      %p102 = por %p100, %p101
      %p103 = scmp.ne.s32.totalorder %s91, %s92
      %p104 = scmp.eq.s32.totalorder %s19, 1
      %p105 = por %p103, %p104
      %p107 = scmp.ne.s32.totalorder %s92, %s106
      %p108 = scmp.eq.s32.totalorder %s19, 0
      %p109 = por %p107, %p108
      %s110 = ssub.s32 %s20, %s32
      %p111 = scmp.eq.s32.totalorder %s110, 0
      %s113 = sadd.s32 %s112, 1
      %s114 = scalar_select %p111, %s112, %s113
      %p117 = pneg %p111
      %p118 = scmp.eq.s32.totalorder %s13, 1
      %p119 = por %p117, %p118
      %p120 = scmp.ne.s32.totalorder %s112, %s115
      %p121 = scmp.eq.s32.totalorder %s13, 0
      %p122 = por %p120, %p121
      %p123 = scmp.ne.s32.totalorder %s112, %s115
      %p124 = scmp.eq.s32.totalorder %s18, 1
      %p125 = por %p123, %p124
      %p126 = scmp.ne.s32.totalorder %s115, %s116
      %p127 = scmp.eq.s32.totalorder %s18, 0
      %p128 = por %p126, %p127
      %p129 = scmp.ne.s32.totalorder %s115, %s116
      %p130 = scmp.eq.s32.totalorder %s19, 1
      %p131 = por %p129, %p130
      %p133 = scmp.ne.s32.totalorder %s116, %s132
      %p134 = scmp.eq.s32.totalorder %s19, 0
      %p135 = por %p133, %p134
      %s136 = ssub.s32 %s21, %s28
      %s137 = ssub.s32 %s20, %s32
      %s138 = sor.u32 %s136, %s137
      %p139 = scmp.eq.s32.totalorder %s138, 0
      %s141 = sadd.s32 %s140, 1
      %s142 = scalar_select %p139, %s140, %s141
      %p145 = pneg %p139
      %p146 = scmp.eq.s32.totalorder %s13, 1
      %p147 = por %p145, %p146
      %p148 = scmp.ne.s32.totalorder %s140, %s143
      %p149 = scmp.eq.s32.totalorder %s13, 0
      %p150 = por %p148, %p149
      %p151 = scmp.ne.s32.totalorder %s140, %s143
      %p152 = scmp.eq.s32.totalorder %s18, 1
      %p153 = por %p151, %p152
      %p154 = scmp.ne.s32.totalorder %s143, %s144
      %p155 = scmp.eq.s32.totalorder %s18, 0
      %p156 = por %p154, %p155
      %p157 = scmp.ne.s32.totalorder %s143, %s144
      %p158 = scmp.eq.s32.totalorder %s19, 1
      %p159 = por %p157, %p158
      %p161 = scmp.ne.s32.totalorder %s144, %s160
      %p162 = scmp.eq.s32.totalorder %s19, 0
      %p163 = por %p161, %p162
      %p164 = scmp.le.s32.totalorder 1, %s13
      %p165 = scmp.lt.s32.totalorder %s13, 3
      %p166 = pnand %p164, %p165
      %p167 = pneg %p166
      // Predicated region
      $region9: #{tpu_custom_call.1} parent=5 // pred_check
        _
      $region10: #{tpu_custom_call.1} parent=5 // pred_check_branch
        %169 = sbr.rel (%p166) target = $region12
      $region11: #{tpu_custom_call.1} parent=5 // pred_region
        %s170 = ssub.s32 %s13, 1
        // Predicated region
        $region13: #{tpu_custom_call.1} parent=11 // pred_check
          %p171 = pneg %p102
        $region14: #{tpu_custom_call.1} parent=11 // pred_check_branch
          %173 = sbr.rel (%p171) target = $region16
        $region15: #{tpu_custom_call.1} parent=11 // pred_region
          _
        $region16: #{tpu_custom_call.1} parent=11 // pred_fallthru
          _
        // Predicated region
        $region17: #{tpu_custom_call.1} parent=11 // pred_check
          %p174 = pneg %p128
        $region18: #{tpu_custom_call.1} parent=11 // pred_check_branch
          %176 = sbr.rel (%p174) target = $region20
        $region19: #{tpu_custom_call.1} parent=11 // pred_region
          %p177 = scmp.lt.s32.totalorder %s22, 7
          %s178 = scalar_select %p177, %s22, 7
          %s179 = smul.addr %s178, 8
          %s180 = scalar_lea.vmem %s3, %s179
        $region20: #{tpu_custom_call.1} parent=11 // pred_fallthru
          _
      $region12: #{tpu_custom_call.1} parent=5 // pred_fallthru
        _
      %p181 = scmp.lt.s32.totalorder %s13, 2
      // Predicated region
      $region21: #{tpu_custom_call.1} parent=5 // pred_check
        %p182 = pneg %p181
      $region22: #{tpu_custom_call.1} parent=5 // pred_check_branch
        %184 = sbr.rel (%p182) target = $region24
      $region23: #{tpu_custom_call.1} parent=5 // pred_region
        // Predicated region
        $region25: #{tpu_custom_call.1} parent=23 // pred_check
          %p185 = pneg %p47
        $region26: #{tpu_custom_call.1} parent=23 // pred_check_branch
          %187 = sbr.rel (%p185) target = $region28
        $region27: #{tpu_custom_call.1} parent=23 // pred_region
          %p188 = scmp.lt.s32.totalorder %s21, 1
          %s189 = scalar_select %p188, %s21, 1
          %p190 = scmp.lt.s32.totalorder %s20, 0
          %s191 = scalar_select %p190, %s20, 0
          %s192 = sadd.s32 %s191, %s189
          %s193 = smul.addr %s192, 8
          %s194 = scalar_lea.vmem %s0, %s193
        $region28: #{tpu_custom_call.1} parent=23 // pred_fallthru
          _
        // Predicated region
        $region29: #{tpu_custom_call.1} parent=23 // pred_check
          %p195 = pneg %p75
        $region30: #{tpu_custom_call.1} parent=23 // pred_check_branch
          %197 = sbr.rel (%p195) target = $region32
        $region31: #{tpu_custom_call.1} parent=23 // pred_region
          %p198 = scmp.lt.s32.totalorder %s21, 1
          %s199 = scalar_select %p198, %s21, 1
          %p200 = scmp.lt.s32.totalorder %s20, 0
          %s201 = scalar_select %p200, %s20, 0
          %s202 = sadd.s32 %s201, %s199
          %s203 = smul.addr %s202, 2
          %s204 = scalar_lea.vmem %s1, %s203
        $region32: #{tpu_custom_call.1} parent=23 // pred_fallthru
          _
      $region24: #{tpu_custom_call.1} parent=5 // pred_fallthru
        _
      %p205 = scmp.le.s32.totalorder 1, %s13
      %p206 = scmp.lt.s32.totalorder %s13, 3
      %p207 = pnand %p205, %p206
      %p208 = pneg %p207
      // Predicated region
      $region33: #{tpu_custom_call.1} parent=5 // pred_check
        _
      $region34: #{tpu_custom_call.1} parent=5 // pred_check_branch
        %210 = sbr.rel (%p207) target = $region36
      $region35: #{tpu_custom_call.1} parent=5 // pred_region
        %s211 = ssub.s32 %s13, 1
        %p212 = scmp.lt.s32.totalorder %s23, 1
        %s213 = scalar_select %p212, %s23, 1
        %p214 = scmp.lt.s32.totalorder %s22, 0
        %s215 = scalar_select %p214, %s22, 0
        %s216 = sadd.s32 %s215, %s213
        %s217 = smul.addr %s216, 8
        %s218 = scalar_lea.vmem %s0, %s217
        %p219 = pneg %p53
        %p220 = pneg %p50
        %p221 = scmp.lt.s32.totalorder %s23, 1
        %s222 = scalar_select %p221, %s23, 1
        %p223 = scmp.lt.s32.totalorder %s22, 0
        %s224 = scalar_select %p223, %s22, 0
        %s225 = sadd.s32 %s224, %s222
        %s226 = smul.addr %s225, 2
        %s227 = scalar_lea.vmem %s1, %s226
        %p228 = pneg %p81
        %p229 = pneg %p78
        %p230 = pneg %p102
        %p231 = pneg %p99
        %p232 = scmp.lt.s32.totalorder %s22, 7
        %s233 = scalar_select %p232, %s22, 7
        %s234 = smul.addr %s233, 8
        %s235 = scalar_lea.vmem %s3, %s234
        %p236 = pneg %p128
        %p237 = pneg %p125
        %p238 = pneg %p156
        %p239 = pneg %p153
        %s240 = sand.u32 %s143, 1
        %s241 = scalar_lea.sflag [#allocation4], %s240
        %s242 = sand.u32 %s143, 1
        %s243 = smul.addr %s242, 8
        %s244 = scalar_lea.vmem [#allocation3], %s243
        %p245 = scmp.lt.s32.totalorder %s23, 1
        %s246 = scalar_select %p245, %s23, 1
        %p247 = scmp.lt.s32.totalorder %s22, 0
        %s248 = scalar_select %p247, %s22, 0
        %s249 = sadd.s32 %s248, %s246
        %s250 = smul.addr %s249, 8
        %s251 = scalar_lea.vmem %s0, %s250
        %p252 = scmp.lt.s32.totalorder %s23, 1
        %s253 = scalar_select %p252, %s23, 1
        %p254 = scmp.lt.s32.totalorder %s22, 0
        %s255 = scalar_select %p254, %s22, 0
        %s256 = sadd.s32 %s255, %s253
        %s257 = smul.addr %s256, 2
        %s258 = scalar_lea.vmem %s1, %s257
        %p259 = scmp.lt.s32.totalorder %s22, 7
        %s260 = scalar_select %p259, %s22, 7
        %s261 = smul.addr %s260, 8
        %s262 = scalar_lea.vmem %s3, %s261
        %v263 = vld [vmem:[%s251] sm:$0xff]
        %v264 = vld [vmem:[%s258] sm:$0x3]
        %vm265 = vcmask 24576
        %266 = vst.msk [vmem:[#allocation2 + $0x7] sm:$0x1] %vm265, %v264
        %vm267 = vcmask 31744
        %268 = vst.msk [vmem:[#allocation2 + $0x8] sm:$0xff] %vm267, %v263
        %vm269 = vcmask 25601
        %270 = vst.msk [vmem:[#allocation2 + $0xf] sm:$0x2] %vm269, %v264
        %v271 = vld [vmem:[#allocation2 + $0x7] sm:$0xff]
        %v272 = vld [vmem:[#allocation2 + $0x9] sm:$0xff]
        %s273 = smul.u32 %s22, 8
        %v274 = vlaneseq
        %v275 = vshrl.u32 %v274, 7
        %v276 = vstv %s273
        %v277 = vadd.s32 %v276, %v275
        %vm278 = vcmp.eq.s32.totalorder %v277, 7
        %v279 = vsel %vm278, %v263, %v272
        %v280 = vld [vmem:[%s2] sm:$0xf]
        %s281 = scalar_lea.vmem %s2, 4
        %v282 = vld [vmem:[%s281] sm:$0xf]
        %v284 = vsel %vm267, %v263, 0
        %vm286 = vcmask 1043456
        %v288 = vsel %vm286, %v282, 0
        %290 = vmatprep.subr.mxu0 0.0
        %291 = vmatpush1.msra.mxu0 0.0
        %292 = vmatprep.subr.mxu0 0.0
        %293 = vmatpush1.msra.mxu0 0.0
        %294 = vmatprep.subr.mxu0 0.0
        %295 = vmatpush1.msra.mxu0 0.0
        %296 = vmatprep.subr.mxu0 0.0
        %297 = vmatpush1.msra.mxu0 0.0
        %298 = vmatprep.subr.mxu0 0.0
        %299 = vmatpush1.msra.mxu0 0.0
        %300 = vmatprep.subr.mxu0 0.0
        %301 = vmatpush1.msra.mxu0 0.0
        %302 = vmatprep.subr.mxu0 0.0
        %303 = vmatpush1.msra.mxu0 0.0
        %304 = vmatprep.subr.mxu0 0.0
        %305 = vmatpush1.msra.mxu0 0.0
        %306 = vmatprep.subr.mxu0 0.0
        %307 = vmatpush1.msra.mxu0 0.0
        %308 = vmatprep.subr.mxu0 0.0
        %309 = vmatpush1.msra.mxu0 0.0
        %310 = vmatprep.subr.mxu0 0.0
        %311 = vmatpush1.msra.mxu0 0.0
        %312 = vmatprep.subr.mxu0 0.0
        %313 = vmatpush1.msra.mxu0 0.0
        %314 = vmatprep.subr.mxu0 0.0
        %315 = vmatpush1.msra.mxu0 0.0
        %316 = vmatprep.subr.mxu0 0.0
        %317 = vmatpush1.msra.mxu0 0.0
        %318 = vmatprep.subr.mxu0 0.0
        %319 = vmatpush1.msra.mxu0 0.0
        %320 = vmatprep.subr.mxu0 0.0
        %v321 = vand.u32 %v288, 4294901760
        %322 = vmatpush1.msra.mxu0 %v321
        %323 = vmatprep.subr.mxu0 0.0
        %324 = vmatpush2.msra.mxu0 0.0
        %325 = vmatprep.subr.mxu0 0.0
        %326 = vmatpush2.msra.mxu0 0.0
        %327 = vmatprep.subr.mxu0 0.0
        %328 = vmatpush2.msra.mxu0 0.0
        %329 = vmatprep.subr.mxu0 0.0
        %330 = vmatpush2.msra.mxu0 0.0
        %331 = vmatprep.subr.mxu0 0.0
        %332 = vmatpush2.msra.mxu0 0.0
        %333 = vmatprep.subr.mxu0 0.0
        %334 = vmatpush2.msra.mxu0 0.0
        %335 = vmatprep.subr.mxu0 0.0
        %336 = vmatpush2.msra.mxu0 0.0
        %337 = vmatprep.subr.mxu0 0.0
        %338 = vmatpush2.msra.mxu0 0.0
        %339 = vmatprep.subr.mxu0 0.0
        %340 = vmatpush2.msra.mxu0 0.0
        %341 = vmatprep.subr.mxu0 0.0
        %342 = vmatpush2.msra.mxu0 0.0
        %343 = vmatprep.subr.mxu0 0.0
        %344 = vmatpush2.msra.mxu0 0.0
        %345 = vmatprep.subr.mxu0 0.0
        %346 = vmatpush2.msra.mxu0 0.0
        %347 = vmatprep.subr.mxu0 0.0
        %348 = vmatpush2.msra.mxu0 0.0
        %349 = vmatprep.subr.mxu0 0.0
        %350 = vmatpush2.msra.mxu0 0.0
        %351 = vmatprep.subr.mxu0 0.0
        %352 = vmatpush2.msra.mxu0 0.0
        %353 = vmatprep.subr.mxu0 0.0
        %354 = vmatpush2.msra.mxu0 0.0
        %355 = vmatprep.mubr.f32.mxu0 0.0
        %v356 = vand.u32 %v284, 4294901760
        %v357 = vsub.f32 %v284, %v356
        %v358 = vand.u32 %v357, 4294901760
        %v359 = vsub.f32 %v357, %v358
        %v360 = vand.u32 %v359, 4294901760
        %361 = vmatmul.mubr.f32.gmra.mxu0 %v360
        %v362 = vpop.f32.mrf.mxu0
        %v363 = vadd.f32 0.0, %v362
        %v364 = vpop.f32.mrf.mxu0
        %365 = vdwg.mxu0
        %366 = vmatprep.subr.mxu0 0.0
        %367 = vmatpush1.msra.mxu0 0.0
        %368 = vmatprep.subr.mxu0 0.0
        %369 = vmatpush1.msra.mxu0 0.0
        %370 = vmatprep.subr.mxu0 0.0
        %371 = vmatpush1.msra.mxu0 0.0
        %372 = vmatprep.subr.mxu0 0.0
        %373 = vmatpush1.msra.mxu0 0.0
        %374 = vmatprep.subr.mxu0 0.0
        %375 = vmatpush1.msra.mxu0 0.0
        %376 = vmatprep.subr.mxu0 0.0
        %377 = vmatpush1.msra.mxu0 0.0
        %378 = vmatprep.subr.mxu0 0.0
        %379 = vmatpush1.msra.mxu0 0.0
        %380 = vmatprep.subr.mxu0 0.0
        %381 = vmatpush1.msra.mxu0 0.0
        %382 = vmatprep.subr.mxu0 0.0
        %383 = vmatpush1.msra.mxu0 0.0
        %384 = vmatprep.subr.mxu0 0.0
        %385 = vmatpush1.msra.mxu0 0.0
        %386 = vmatprep.subr.mxu0 0.0
        %387 = vmatpush1.msra.mxu0 0.0
        %388 = vmatprep.subr.mxu0 0.0
        %389 = vmatpush1.msra.mxu0 0.0
        %390 = vmatprep.subr.mxu0 0.0
        %391 = vmatpush1.msra.mxu0 0.0
        %392 = vmatprep.subr.mxu0 0.0
        %393 = vmatpush1.msra.mxu0 0.0
        %394 = vmatprep.subr.mxu0 0.0
        %395 = vmatpush1.msra.mxu0 0.0
        %396 = vmatprep.subr.mxu0 0.0
        %v397 = vand.u32 %v288, 4294901760
        %v398 = vsub.f32 %v288, %v397
        %v399 = vand.u32 %v398, 4294901760
        %v400 = vsub.f32 %v398, %v399
        %v401 = vand.u32 %v400, 4294901760
        %402 = vmatpush1.msra.mxu0 %v401
        %403 = vmatprep.subr.mxu0 0.0
        %404 = vmatpush2.msra.mxu0 0.0
        %405 = vmatprep.subr.mxu0 0.0
        %406 = vmatpush2.msra.mxu0 0.0
        %407 = vmatprep.subr.mxu0 0.0
        %408 = vmatpush2.msra.mxu0 0.0
        %409 = vmatprep.subr.mxu0 0.0
        %410 = vmatpush2.msra.mxu0 0.0
        %411 = vmatprep.subr.mxu0 0.0
        %412 = vmatpush2.msra.mxu0 0.0
        %413 = vmatprep.subr.mxu0 0.0
        %414 = vmatpush2.msra.mxu0 0.0
        %415 = vmatprep.subr.mxu0 0.0
        %416 = vmatpush2.msra.mxu0 0.0
        %417 = vmatprep.subr.mxu0 0.0
        %418 = vmatpush2.msra.mxu0 0.0
        %419 = vmatprep.subr.mxu0 0.0
        %420 = vmatpush2.msra.mxu0 0.0
        %421 = vmatprep.subr.mxu0 0.0
        %422 = vmatpush2.msra.mxu0 0.0
        %423 = vmatprep.subr.mxu0 0.0
        %424 = vmatpush2.msra.mxu0 0.0
        %425 = vmatprep.subr.mxu0 0.0
        %426 = vmatpush2.msra.mxu0 0.0
        %427 = vmatprep.subr.mxu0 0.0
        %428 = vmatpush2.msra.mxu0 0.0
        %429 = vmatprep.subr.mxu0 0.0
        %430 = vmatpush2.msra.mxu0 0.0
        %431 = vmatprep.subr.mxu0 0.0
        %432 = vmatpush2.msra.mxu0 0.0
        %433 = vmatprep.subr.mxu0 0.0
        %434 = vmatpush2.msra.mxu0 0.0
        %435 = vmatprep.mubr.f32.mxu0 0.0
        %v436 = vand.u32 %v284, 4294901760
        %437 = vmatmul.mubr.f32.gmra.mxu0 %v436
        %v438 = vpop.f32.mrf.mxu0
        %v439 = vadd.f32 %v363, %v438
        %v440 = vpop.f32.mrf.mxu0
        %441 = vdwg.mxu0
        %442 = vmatprep.subr.mxu0 0.0
        %443 = vmatpush1.msra.mxu0 0.0
        %444 = vmatprep.subr.mxu0 0.0
        %445 = vmatpush1.msra.mxu0 0.0
        %446 = vmatprep.subr.mxu0 0.0
        %447 = vmatpush1.msra.mxu0 0.0
        %448 = vmatprep.subr.mxu0 0.0
        %449 = vmatpush1.msra.mxu0 0.0
        %450 = vmatprep.subr.mxu0 0.0
        %451 = vmatpush1.msra.mxu0 0.0
        %452 = vmatprep.subr.mxu0 0.0
        %453 = vmatpush1.msra.mxu0 0.0
        %454 = vmatprep.subr.mxu0 0.0
        %455 = vmatpush1.msra.mxu0 0.0
        %456 = vmatprep.subr.mxu0 0.0
        %457 = vmatpush1.msra.mxu0 0.0
        %458 = vmatprep.subr.mxu0 0.0
        %459 = vmatpush1.msra.mxu0 0.0
        %460 = vmatprep.subr.mxu0 0.0
        %461 = vmatpush1.msra.mxu0 0.0
        %462 = vmatprep.subr.mxu0 0.0
        %463 = vmatpush1.msra.mxu0 0.0
        %464 = vmatprep.subr.mxu0 0.0
        %465 = vmatpush1.msra.mxu0 0.0
        %466 = vmatprep.subr.mxu0 0.0
        %467 = vmatpush1.msra.mxu0 0.0
        %468 = vmatprep.subr.mxu0 0.0
        %469 = vmatpush1.msra.mxu0 0.0
        %470 = vmatprep.subr.mxu0 0.0
        %471 = vmatpush1.msra.mxu0 0.0
        %472 = vmatprep.subr.mxu0 0.0
        %v473 = vand.u32 %v288, 4294901760
        %v474 = vsub.f32 %v288, %v473
        %475 = vmatpush1.msra.mxu0 %v474
        %476 = vmatprep.subr.mxu0 0.0
        %477 = vmatpush2.msra.mxu0 0.0
        %478 = vmatprep.subr.mxu0 0.0
        %479 = vmatpush2.msra.mxu0 0.0
        %480 = vmatprep.subr.mxu0 0.0
        %481 = vmatpush2.msra.mxu0 0.0
        %482 = vmatprep.subr.mxu0 0.0
        %483 = vmatpush2.msra.mxu0 0.0
        %484 = vmatprep.subr.mxu0 0.0
        %485 = vmatpush2.msra.mxu0 0.0
        %486 = vmatprep.subr.mxu0 0.0
        %487 = vmatpush2.msra.mxu0 0.0
        %488 = vmatprep.subr.mxu0 0.0
        %489 = vmatpush2.msra.mxu0 0.0
        %490 = vmatprep.subr.mxu0 0.0
        %491 = vmatpush2.msra.mxu0 0.0
        %492 = vmatprep.subr.mxu0 0.0
        %493 = vmatpush2.msra.mxu0 0.0
        %494 = vmatprep.subr.mxu0 0.0
        %495 = vmatpush2.msra.mxu0 0.0
        %496 = vmatprep.subr.mxu0 0.0
        %497 = vmatpush2.msra.mxu0 0.0
        %498 = vmatprep.subr.mxu0 0.0
        %499 = vmatpush2.msra.mxu0 0.0
        %500 = vmatprep.subr.mxu0 0.0
        %501 = vmatpush2.msra.mxu0 0.0
        %502 = vmatprep.subr.mxu0 0.0
        %503 = vmatpush2.msra.mxu0 0.0
        %504 = vmatprep.subr.mxu0 0.0
        %505 = vmatpush2.msra.mxu0 0.0
        %506 = vmatprep.subr.mxu0 0.0
        %507 = vmatpush2.msra.mxu0 0.0
        %508 = vmatprep.mubr.f32.mxu0 0.0
        %v509 = vand.u32 %v284, 4294901760
        %v510 = vsub.f32 %v284, %v509
        %511 = vmatmul.mubr.f32.gmra.mxu0 %v510
        %v512 = vpop.f32.mrf.mxu0
        %v513 = vadd.f32 %v439, %v512
        %v514 = vpop.f32.mrf.mxu0
        %515 = vdwg.mxu0
        %516 = vmatprep.subr.mxu0 0.0
        %517 = vmatpush1.msra.mxu0 0.0
        %518 = vmatprep.subr.mxu0 0.0
        %519 = vmatpush1.msra.mxu0 0.0
        %520 = vmatprep.subr.mxu0 0.0
        %521 = vmatpush1.msra.mxu0 0.0
        %522 = vmatprep.subr.mxu0 0.0
        %523 = vmatpush1.msra.mxu0 0.0
        %524 = vmatprep.subr.mxu0 0.0
        %525 = vmatpush1.msra.mxu0 0.0
        %526 = vmatprep.subr.mxu0 0.0
        %527 = vmatpush1.msra.mxu0 0.0
        %528 = vmatprep.subr.mxu0 0.0
        %529 = vmatpush1.msra.mxu0 0.0
        %530 = vmatprep.subr.mxu0 0.0
        %531 = vmatpush1.msra.mxu0 0.0
        %532 = vmatprep.subr.mxu0 0.0
        %533 = vmatpush1.msra.mxu0 0.0
        %534 = vmatprep.subr.mxu0 0.0
        %535 = vmatpush1.msra.mxu0 0.0
        %536 = vmatprep.subr.mxu0 0.0
        %537 = vmatpush1.msra.mxu0 0.0
        %538 = vmatprep.subr.mxu0 0.0
        %539 = vmatpush1.msra.mxu0 0.0
        %540 = vmatprep.subr.mxu0 0.0
        %541 = vmatpush1.msra.mxu0 0.0
        %542 = vmatprep.subr.mxu0 0.0
        %543 = vmatpush1.msra.mxu0 0.0
        %544 = vmatprep.subr.mxu0 0.0
        %545 = vmatpush1.msra.mxu0 0.0
        %546 = vmatprep.subr.mxu0 0.0
        %v547 = vand.u32 %v288, 4294901760
        %548 = vmatpush1.msra.mxu0 %v547
        %549 = vmatprep.subr.mxu0 0.0
        %550 = vmatpush2.msra.mxu0 0.0
        %551 = vmatprep.subr.mxu0 0.0
        %552 = vmatpush2.msra.mxu0 0.0
        %553 = vmatprep.subr.mxu0 0.0
        %554 = vmatpush2.msra.mxu0 0.0
        %555 = vmatprep.subr.mxu0 0.0
        %556 = vmatpush2.msra.mxu0 0.0
        %557 = vmatprep.subr.mxu0 0.0
        %558 = vmatpush2.msra.mxu0 0.0
        %559 = vmatprep.subr.mxu0 0.0
        %560 = vmatpush2.msra.mxu0 0.0
        %561 = vmatprep.subr.mxu0 0.0
        %562 = vmatpush2.msra.mxu0 0.0
        %563 = vmatprep.subr.mxu0 0.0
        %564 = vmatpush2.msra.mxu0 0.0
        %565 = vmatprep.subr.mxu0 0.0
        %566 = vmatpush2.msra.mxu0 0.0
        %567 = vmatprep.subr.mxu0 0.0
        %568 = vmatpush2.msra.mxu0 0.0
        %569 = vmatprep.subr.mxu0 0.0
        %570 = vmatpush2.msra.mxu0 0.0
        %571 = vmatprep.subr.mxu0 0.0
        %572 = vmatpush2.msra.mxu0 0.0
        %573 = vmatprep.subr.mxu0 0.0
        %574 = vmatpush2.msra.mxu0 0.0
        %575 = vmatprep.subr.mxu0 0.0
        %576 = vmatpush2.msra.mxu0 0.0
        %577 = vmatprep.subr.mxu0 0.0
        %578 = vmatpush2.msra.mxu0 0.0
        %579 = vmatprep.subr.mxu0 0.0
        %580 = vmatpush2.msra.mxu0 0.0
        %581 = vmatprep.mubr.f32.mxu0 0.0
        %v582 = vand.u32 %v284, 4294901760
        %v583 = vsub.f32 %v284, %v582
        %v584 = vand.u32 %v583, 4294901760
        %585 = vmatmul.mubr.f32.gmra.mxu0 %v584
        %v586 = vpop.f32.mrf.mxu0
        %v587 = vadd.f32 %v513, %v586
        %v588 = vpop.f32.mrf.mxu0
        %589 = vdwg.mxu0
        %590 = vmatprep.subr.mxu0 0.0
        %591 = vmatpush1.msra.mxu0 0.0
        %592 = vmatprep.subr.mxu0 0.0
        %593 = vmatpush1.msra.mxu0 0.0
        %594 = vmatprep.subr.mxu0 0.0
        %595 = vmatpush1.msra.mxu0 0.0
        %596 = vmatprep.subr.mxu0 0.0
        %597 = vmatpush1.msra.mxu0 0.0
        %598 = vmatprep.subr.mxu0 0.0
        %599 = vmatpush1.msra.mxu0 0.0
        %600 = vmatprep.subr.mxu0 0.0
        %601 = vmatpush1.msra.mxu0 0.0
        %602 = vmatprep.subr.mxu0 0.0
        %603 = vmatpush1.msra.mxu0 0.0
        %604 = vmatprep.subr.mxu0 0.0
        %605 = vmatpush1.msra.mxu0 0.0
        %606 = vmatprep.subr.mxu0 0.0
        %607 = vmatpush1.msra.mxu0 0.0
        %608 = vmatprep.subr.mxu0 0.0
        %609 = vmatpush1.msra.mxu0 0.0
        %610 = vmatprep.subr.mxu0 0.0
        %611 = vmatpush1.msra.mxu0 0.0
        %612 = vmatprep.subr.mxu0 0.0
        %613 = vmatpush1.msra.mxu0 0.0
        %614 = vmatprep.subr.mxu0 0.0
        %615 = vmatpush1.msra.mxu0 0.0
        %616 = vmatprep.subr.mxu0 0.0
        %617 = vmatpush1.msra.mxu0 0.0
        %618 = vmatprep.subr.mxu0 0.0
        %619 = vmatpush1.msra.mxu0 0.0
        %620 = vmatprep.subr.mxu0 0.0
        %v621 = vand.u32 %v288, 4294901760
        %v622 = vsub.f32 %v288, %v621
        %v623 = vand.u32 %v622, 4294901760
        %624 = vmatpush1.msra.mxu0 %v623
        %625 = vmatprep.subr.mxu0 0.0
        %626 = vmatpush2.msra.mxu0 0.0
        %627 = vmatprep.subr.mxu0 0.0
        %628 = vmatpush2.msra.mxu0 0.0
        %629 = vmatprep.subr.mxu0 0.0
        %630 = vmatpush2.msra.mxu0 0.0
        %631 = vmatprep.subr.mxu0 0.0
        %632 = vmatpush2.msra.mxu0 0.0
        %633 = vmatprep.subr.mxu0 0.0
        %634 = vmatpush2.msra.mxu0 0.0
        %635 = vmatprep.subr.mxu0 0.0
        %636 = vmatpush2.msra.mxu0 0.0
        %637 = vmatprep.subr.mxu0 0.0
        %638 = vmatpush2.msra.mxu0 0.0
        %639 = vmatprep.subr.mxu0 0.0
        %640 = vmatpush2.msra.mxu0 0.0
        %641 = vmatprep.subr.mxu0 0.0
        %642 = vmatpush2.msra.mxu0 0.0
        %643 = vmatprep.subr.mxu0 0.0
        %644 = vmatpush2.msra.mxu0 0.0
        %645 = vmatprep.subr.mxu0 0.0
        %646 = vmatpush2.msra.mxu0 0.0
        %647 = vmatprep.subr.mxu0 0.0
        %648 = vmatpush2.msra.mxu0 0.0
        %649 = vmatprep.subr.mxu0 0.0
        %650 = vmatpush2.msra.mxu0 0.0
        %651 = vmatprep.subr.mxu0 0.0
        %652 = vmatpush2.msra.mxu0 0.0
        %653 = vmatprep.subr.mxu0 0.0
        %654 = vmatpush2.msra.mxu0 0.0
        %655 = vmatprep.subr.mxu0 0.0
        %656 = vmatpush2.msra.mxu0 0.0
        %657 = vmatprep.mubr.f32.mxu0 0.0
        %v658 = vand.u32 %v284, 4294901760
        %659 = vmatmul.mubr.f32.gmra.mxu0 %v658
        %v660 = vpop.f32.mrf.mxu0
        %v661 = vadd.f32 %v587, %v660
        %v662 = vpop.f32.mrf.mxu0
        %663 = vdwg.mxu0
        %664 = vmatprep.subr.mxu0 0.0
        %665 = vmatpush1.msra.mxu0 0.0
        %666 = vmatprep.subr.mxu0 0.0
        %667 = vmatpush1.msra.mxu0 0.0
        %668 = vmatprep.subr.mxu0 0.0
        %669 = vmatpush1.msra.mxu0 0.0
        %670 = vmatprep.subr.mxu0 0.0
        %671 = vmatpush1.msra.mxu0 0.0
        %672 = vmatprep.subr.mxu0 0.0
        %673 = vmatpush1.msra.mxu0 0.0
        %674 = vmatprep.subr.mxu0 0.0
        %675 = vmatpush1.msra.mxu0 0.0
        %676 = vmatprep.subr.mxu0 0.0
        %677 = vmatpush1.msra.mxu0 0.0
        %678 = vmatprep.subr.mxu0 0.0
        %679 = vmatpush1.msra.mxu0 0.0
        %680 = vmatprep.subr.mxu0 0.0
        %681 = vmatpush1.msra.mxu0 0.0
        %682 = vmatprep.subr.mxu0 0.0
        %683 = vmatpush1.msra.mxu0 0.0
        %684 = vmatprep.subr.mxu0 0.0
        %685 = vmatpush1.msra.mxu0 0.0
        %686 = vmatprep.subr.mxu0 0.0
        %687 = vmatpush1.msra.mxu0 0.0
        %688 = vmatprep.subr.mxu0 0.0
        %689 = vmatpush1.msra.mxu0 0.0
        %690 = vmatprep.subr.mxu0 0.0
        %691 = vmatpush1.msra.mxu0 0.0
        %692 = vmatprep.subr.mxu0 0.0
        %693 = vmatpush1.msra.mxu0 0.0
        %694 = vmatprep.subr.mxu0 0.0
        %v695 = vand.u32 %v288, 4294901760
        %696 = vmatpush1.msra.mxu0 %v695
        %697 = vmatprep.subr.mxu0 0.0
        %698 = vmatpush2.msra.mxu0 0.0
        %699 = vmatprep.subr.mxu0 0.0
        %700 = vmatpush2.msra.mxu0 0.0
        %701 = vmatprep.subr.mxu0 0.0
        %702 = vmatpush2.msra.mxu0 0.0
        %703 = vmatprep.subr.mxu0 0.0
        %704 = vmatpush2.msra.mxu0 0.0
        %705 = vmatprep.subr.mxu0 0.0
        %706 = vmatpush2.msra.mxu0 0.0
        %707 = vmatprep.subr.mxu0 0.0
        %708 = vmatpush2.msra.mxu0 0.0
        %709 = vmatprep.subr.mxu0 0.0
        %710 = vmatpush2.msra.mxu0 0.0
        %711 = vmatprep.subr.mxu0 0.0
        %712 = vmatpush2.msra.mxu0 0.0
        %713 = vmatprep.subr.mxu0 0.0
        %714 = vmatpush2.msra.mxu0 0.0
        %715 = vmatprep.subr.mxu0 0.0
        %716 = vmatpush2.msra.mxu0 0.0
        %717 = vmatprep.subr.mxu0 0.0
        %718 = vmatpush2.msra.mxu0 0.0
        %719 = vmatprep.subr.mxu0 0.0
        %720 = vmatpush2.msra.mxu0 0.0
        %721 = vmatprep.subr.mxu0 0.0
        %722 = vmatpush2.msra.mxu0 0.0
        %723 = vmatprep.subr.mxu0 0.0
        %724 = vmatpush2.msra.mxu0 0.0
        %725 = vmatprep.subr.mxu0 0.0
        %726 = vmatpush2.msra.mxu0 0.0
        %727 = vmatprep.subr.mxu0 0.0
        %728 = vmatpush2.msra.mxu0 0.0
        %729 = vmatprep.mubr.f32.mxu0 0.0
        %v730 = vand.u32 %v284, 4294901760
        %731 = vmatmul.mubr.f32.gmra.mxu0 %v730
        %v732 = vpop.f32.mrf.mxu0
        %v733 = vadd.f32 %v661, %v732
        %v734 = vpop.f32.mrf.mxu0
        %735 = vdwg.mxu0
        %v737 = vsel %vm267, %v271, 0
        %v740 = vsel %vm286, %v280, 0
        %742 = vmatprep.subr.mxu0 0.0
        %743 = vmatpush1.msra.mxu0 0.0
        %744 = vmatprep.subr.mxu0 0.0
        %745 = vmatpush1.msra.mxu0 0.0
        %746 = vmatprep.subr.mxu0 0.0
        %747 = vmatpush1.msra.mxu0 0.0
        %748 = vmatprep.subr.mxu0 0.0
        %749 = vmatpush1.msra.mxu0 0.0
        %750 = vmatprep.subr.mxu0 0.0
        %751 = vmatpush1.msra.mxu0 0.0
        %752 = vmatprep.subr.mxu0 0.0
        %753 = vmatpush1.msra.mxu0 0.0
        %754 = vmatprep.subr.mxu0 0.0
        %755 = vmatpush1.msra.mxu0 0.0
        %756 = vmatprep.subr.mxu0 0.0
        %757 = vmatpush1.msra.mxu0 0.0
        %758 = vmatprep.subr.mxu0 0.0
        %759 = vmatpush1.msra.mxu0 0.0
        %760 = vmatprep.subr.mxu0 0.0
        %761 = vmatpush1.msra.mxu0 0.0
        %762 = vmatprep.subr.mxu0 0.0
        %763 = vmatpush1.msra.mxu0 0.0
        %764 = vmatprep.subr.mxu0 0.0
        %765 = vmatpush1.msra.mxu0 0.0
        %766 = vmatprep.subr.mxu0 0.0
        %767 = vmatpush1.msra.mxu0 0.0
        %768 = vmatprep.subr.mxu0 0.0
        %769 = vmatpush1.msra.mxu0 0.0
        %770 = vmatprep.subr.mxu0 0.0
        %771 = vmatpush1.msra.mxu0 0.0
        %772 = vmatprep.subr.mxu0 0.0
        %v773 = vand.u32 %v740, 4294901760
        %774 = vmatpush1.msra.mxu0 %v773
        %775 = vmatprep.subr.mxu0 0.0
        %776 = vmatpush2.msra.mxu0 0.0
        %777 = vmatprep.subr.mxu0 0.0
        %778 = vmatpush2.msra.mxu0 0.0
        %779 = vmatprep.subr.mxu0 0.0
        %780 = vmatpush2.msra.mxu0 0.0
        %781 = vmatprep.subr.mxu0 0.0
        %782 = vmatpush2.msra.mxu0 0.0
        %783 = vmatprep.subr.mxu0 0.0
        %784 = vmatpush2.msra.mxu0 0.0
        %785 = vmatprep.subr.mxu0 0.0
        %786 = vmatpush2.msra.mxu0 0.0
        %787 = vmatprep.subr.mxu0 0.0
        %788 = vmatpush2.msra.mxu0 0.0
        %789 = vmatprep.subr.mxu0 0.0
        %790 = vmatpush2.msra.mxu0 0.0
        %791 = vmatprep.subr.mxu0 0.0
        %792 = vmatpush2.msra.mxu0 0.0
        %793 = vmatprep.subr.mxu0 0.0
        %794 = vmatpush2.msra.mxu0 0.0
        %795 = vmatprep.subr.mxu0 0.0
        %796 = vmatpush2.msra.mxu0 0.0
        %797 = vmatprep.subr.mxu0 0.0
        %798 = vmatpush2.msra.mxu0 0.0
        %799 = vmatprep.subr.mxu0 0.0
        %800 = vmatpush2.msra.mxu0 0.0
        %801 = vmatprep.subr.mxu0 0.0
        %802 = vmatpush2.msra.mxu0 0.0
        %803 = vmatprep.subr.mxu0 0.0
        %804 = vmatpush2.msra.mxu0 0.0
        %805 = vmatprep.subr.mxu0 0.0
        %806 = vmatpush2.msra.mxu0 0.0
        %807 = vmatprep.mubr.f32.mxu0 0.0
        %v808 = vand.u32 %v737, 4294901760
        %v809 = vsub.f32 %v737, %v808
        %v810 = vand.u32 %v809, 4294901760
        %v811 = vsub.f32 %v809, %v810
        %v812 = vand.u32 %v811, 4294901760
        %813 = vmatmul.mubr.f32.gmra.mxu0 %v812
        %v814 = vpop.f32.mrf.mxu0
        %v815 = vadd.f32 %v733, %v814
        %v816 = vpop.f32.mrf.mxu0
        %817 = vdwg.mxu0
        %818 = vmatprep.subr.mxu0 0.0
        %819 = vmatpush1.msra.mxu0 0.0
        %820 = vmatprep.subr.mxu0 0.0
        %821 = vmatpush1.msra.mxu0 0.0
        %822 = vmatprep.subr.mxu0 0.0
        %823 = vmatpush1.msra.mxu0 0.0
        %824 = vmatprep.subr.mxu0 0.0
        %825 = vmatpush1.msra.mxu0 0.0
        %826 = vmatprep.subr.mxu0 0.0
        %827 = vmatpush1.msra.mxu0 0.0
        %828 = vmatprep.subr.mxu0 0.0
        %829 = vmatpush1.msra.mxu0 0.0
        %830 = vmatprep.subr.mxu0 0.0
        %831 = vmatpush1.msra.mxu0 0.0
        %832 = vmatprep.subr.mxu0 0.0
        %833 = vmatpush1.msra.mxu0 0.0
        %834 = vmatprep.subr.mxu0 0.0
        %835 = vmatpush1.msra.mxu0 0.0
        %836 = vmatprep.subr.mxu0 0.0
        %837 = vmatpush1.msra.mxu0 0.0
        %838 = vmatprep.subr.mxu0 0.0
        %839 = vmatpush1.msra.mxu0 0.0
        %840 = vmatprep.subr.mxu0 0.0
        %841 = vmatpush1.msra.mxu0 0.0
        %842 = vmatprep.subr.mxu0 0.0
        %843 = vmatpush1.msra.mxu0 0.0
        %844 = vmatprep.subr.mxu0 0.0
        %845 = vmatpush1.msra.mxu0 0.0
        %846 = vmatprep.subr.mxu0 0.0
        %847 = vmatpush1.msra.mxu0 0.0
        %848 = vmatprep.subr.mxu0 0.0
        %v849 = vand.u32 %v740, 4294901760
        %v850 = vsub.f32 %v740, %v849
        %v851 = vand.u32 %v850, 4294901760
        %v852 = vsub.f32 %v850, %v851
        %v853 = vand.u32 %v852, 4294901760
        %854 = vmatpush1.msra.mxu0 %v853
        %855 = vmatprep.subr.mxu0 0.0
        %856 = vmatpush2.msra.mxu0 0.0
        %857 = vmatprep.subr.mxu0 0.0
        %858 = vmatpush2.msra.mxu0 0.0
        %859 = vmatprep.subr.mxu0 0.0
        %860 = vmatpush2.msra.mxu0 0.0
        %861 = vmatprep.subr.mxu0 0.0
        %862 = vmatpush2.msra.mxu0 0.0
        %863 = vmatprep.subr.mxu0 0.0
        %864 = vmatpush2.msra.mxu0 0.0
        %865 = vmatprep.subr.mxu0 0.0
        %866 = vmatpush2.msra.mxu0 0.0
        %867 = vmatprep.subr.mxu0 0.0
        %868 = vmatpush2.msra.mxu0 0.0
        %869 = vmatprep.subr.mxu0 0.0
        %870 = vmatpush2.msra.mxu0 0.0
        %871 = vmatprep.subr.mxu0 0.0
        %872 = vmatpush2.msra.mxu0 0.0
        %873 = vmatprep.subr.mxu0 0.0
        %874 = vmatpush2.msra.mxu0 0.0
        %875 = vmatprep.subr.mxu0 0.0
        %876 = vmatpush2.msra.mxu0 0.0
        %877 = vmatprep.subr.mxu0 0.0
        %878 = vmatpush2.msra.mxu0 0.0
        %879 = vmatprep.subr.mxu0 0.0
        %880 = vmatpush2.msra.mxu0 0.0
        %881 = vmatprep.subr.mxu0 0.0
        %882 = vmatpush2.msra.mxu0 0.0
        %883 = vmatprep.subr.mxu0 0.0
        %884 = vmatpush2.msra.mxu0 0.0
        %885 = vmatprep.subr.mxu0 0.0
        %886 = vmatpush2.msra.mxu0 0.0
        %887 = vmatprep.mubr.f32.mxu0 0.0
        %v888 = vand.u32 %v737, 4294901760
        %889 = vmatmul.mubr.f32.gmra.mxu0 %v888
        %v890 = vpop.f32.mrf.mxu0
        %v891 = vadd.f32 %v815, %v890
        %v892 = vpop.f32.mrf.mxu0
        %893 = vdwg.mxu0
        %894 = vmatprep.subr.mxu0 0.0
        %895 = vmatpush1.msra.mxu0 0.0
        %896 = vmatprep.subr.mxu0 0.0
        %897 = vmatpush1.msra.mxu0 0.0
        %898 = vmatprep.subr.mxu0 0.0
        %899 = vmatpush1.msra.mxu0 0.0
        %900 = vmatprep.subr.mxu0 0.0
        %901 = vmatpush1.msra.mxu0 0.0
        %902 = vmatprep.subr.mxu0 0.0
        %903 = vmatpush1.msra.mxu0 0.0
        %904 = vmatprep.subr.mxu0 0.0
        %905 = vmatpush1.msra.mxu0 0.0
        %906 = vmatprep.subr.mxu0 0.0
        %907 = vmatpush1.msra.mxu0 0.0
        %908 = vmatprep.subr.mxu0 0.0
        %909 = vmatpush1.msra.mxu0 0.0
        %910 = vmatprep.subr.mxu0 0.0
        %911 = vmatpush1.msra.mxu0 0.0
        %912 = vmatprep.subr.mxu0 0.0
        %913 = vmatpush1.msra.mxu0 0.0
        %914 = vmatprep.subr.mxu0 0.0
        %915 = vmatpush1.msra.mxu0 0.0
        %916 = vmatprep.subr.mxu0 0.0
        %917 = vmatpush1.msra.mxu0 0.0
        %918 = vmatprep.subr.mxu0 0.0
        %919 = vmatpush1.msra.mxu0 0.0
        %920 = vmatprep.subr.mxu0 0.0
        %921 = vmatpush1.msra.mxu0 0.0
        %922 = vmatprep.subr.mxu0 0.0
        %923 = vmatpush1.msra.mxu0 0.0
        %924 = vmatprep.subr.mxu0 0.0
        %v925 = vand.u32 %v740, 4294901760
        %v926 = vsub.f32 %v740, %v925
        %927 = vmatpush1.msra.mxu0 %v926
        %928 = vmatprep.subr.mxu0 0.0
        %929 = vmatpush2.msra.mxu0 0.0
        %930 = vmatprep.subr.mxu0 0.0
        %931 = vmatpush2.msra.mxu0 0.0
        %932 = vmatprep.subr.mxu0 0.0
        %933 = vmatpush2.msra.mxu0 0.0
        %934 = vmatprep.subr.mxu0 0.0
        %935 = vmatpush2.msra.mxu0 0.0
        %936 = vmatprep.subr.mxu0 0.0
        %937 = vmatpush2.msra.mxu0 0.0
        %938 = vmatprep.subr.mxu0 0.0
        %939 = vmatpush2.msra.mxu0 0.0
        %940 = vmatprep.subr.mxu0 0.0
        %941 = vmatpush2.msra.mxu0 0.0
        %942 = vmatprep.subr.mxu0 0.0
        %943 = vmatpush2.msra.mxu0 0.0
        %944 = vmatprep.subr.mxu0 0.0
        %945 = vmatpush2.msra.mxu0 0.0
        %946 = vmatprep.subr.mxu0 0.0
        %947 = vmatpush2.msra.mxu0 0.0
        %948 = vmatprep.subr.mxu0 0.0
        %949 = vmatpush2.msra.mxu0 0.0
        %950 = vmatprep.subr.mxu0 0.0
        %951 = vmatpush2.msra.mxu0 0.0
        %952 = vmatprep.subr.mxu0 0.0
        %953 = vmatpush2.msra.mxu0 0.0
        %954 = vmatprep.subr.mxu0 0.0
        %955 = vmatpush2.msra.mxu0 0.0
        %956 = vmatprep.subr.mxu0 0.0
        %957 = vmatpush2.msra.mxu0 0.0
        %958 = vmatprep.subr.mxu0 0.0
        %959 = vmatpush2.msra.mxu0 0.0
        %960 = vmatprep.mubr.f32.mxu0 0.0
        %v961 = vand.u32 %v737, 4294901760
        %v962 = vsub.f32 %v737, %v961
        %963 = vmatmul.mubr.f32.gmra.mxu0 %v962
        %v964 = vpop.f32.mrf.mxu0
        %v965 = vadd.f32 %v891, %v964
        %v966 = vpop.f32.mrf.mxu0
        %967 = vdwg.mxu0
        %968 = vmatprep.subr.mxu0 0.0
        %969 = vmatpush1.msra.mxu0 0.0
        %970 = vmatprep.subr.mxu0 0.0
        %971 = vmatpush1.msra.mxu0 0.0
        %972 = vmatprep.subr.mxu0 0.0
        %973 = vmatpush1.msra.mxu0 0.0
        %974 = vmatprep.subr.mxu0 0.0
        %975 = vmatpush1.msra.mxu0 0.0
        %976 = vmatprep.subr.mxu0 0.0
        %977 = vmatpush1.msra.mxu0 0.0
        %978 = vmatprep.subr.mxu0 0.0
        %979 = vmatpush1.msra.mxu0 0.0
        %980 = vmatprep.subr.mxu0 0.0
        %981 = vmatpush1.msra.mxu0 0.0
        %982 = vmatprep.subr.mxu0 0.0
        %983 = vmatpush1.msra.mxu0 0.0
        %984 = vmatprep.subr.mxu0 0.0
        %985 = vmatpush1.msra.mxu0 0.0
        %986 = vmatprep.subr.mxu0 0.0
        %987 = vmatpush1.msra.mxu0 0.0
        %988 = vmatprep.subr.mxu0 0.0
        %989 = vmatpush1.msra.mxu0 0.0
        %990 = vmatprep.subr.mxu0 0.0
        %991 = vmatpush1.msra.mxu0 0.0
        %992 = vmatprep.subr.mxu0 0.0
        %993 = vmatpush1.msra.mxu0 0.0
        %994 = vmatprep.subr.mxu0 0.0
        %995 = vmatpush1.msra.mxu0 0.0
        %996 = vmatprep.subr.mxu0 0.0
        %997 = vmatpush1.msra.mxu0 0.0
        %998 = vmatprep.subr.mxu0 0.0
        %v999 = vand.u32 %v740, 4294901760
        %1000 = vmatpush1.msra.mxu0 %v999
        %1001 = vmatprep.subr.mxu0 0.0
        %1002 = vmatpush2.msra.mxu0 0.0
        %1003 = vmatprep.subr.mxu0 0.0
        %1004 = vmatpush2.msra.mxu0 0.0
        %1005 = vmatprep.subr.mxu0 0.0
        %1006 = vmatpush2.msra.mxu0 0.0
        %1007 = vmatprep.subr.mxu0 0.0
        %1008 = vmatpush2.msra.mxu0 0.0
        %1009 = vmatprep.subr.mxu0 0.0
        %1010 = vmatpush2.msra.mxu0 0.0
        %1011 = vmatprep.subr.mxu0 0.0
        %1012 = vmatpush2.msra.mxu0 0.0
        %1013 = vmatprep.subr.mxu0 0.0
        %1014 = vmatpush2.msra.mxu0 0.0
        %1015 = vmatprep.subr.mxu0 0.0
        %1016 = vmatpush2.msra.mxu0 0.0
        %1017 = vmatprep.subr.mxu0 0.0
        %1018 = vmatpush2.msra.mxu0 0.0
        %1019 = vmatprep.subr.mxu0 0.0
        %1020 = vmatpush2.msra.mxu0 0.0
        %1021 = vmatprep.subr.mxu0 0.0
        %1022 = vmatpush2.msra.mxu0 0.0
        %1023 = vmatprep.subr.mxu0 0.0
        %1024 = vmatpush2.msra.mxu0 0.0
        %1025 = vmatprep.subr.mxu0 0.0
        %1026 = vmatpush2.msra.mxu0 0.0
        %1027 = vmatprep.subr.mxu0 0.0
        %1028 = vmatpush2.msra.mxu0 0.0
        %1029 = vmatprep.subr.mxu0 0.0
        %1030 = vmatpush2.msra.mxu0 0.0
        %1031 = vmatprep.subr.mxu0 0.0
        %1032 = vmatpush2.msra.mxu0 0.0
        %1033 = vmatprep.mubr.f32.mxu0 0.0
        %v1034 = vand.u32 %v737, 4294901760
        %v1035 = vsub.f32 %v737, %v1034
        %v1036 = vand.u32 %v1035, 4294901760
        %1037 = vmatmul.mubr.f32.gmra.mxu0 %v1036
        %v1038 = vpop.f32.mrf.mxu0
        %v1039 = vadd.f32 %v965, %v1038
        %v1040 = vpop.f32.mrf.mxu0
        %1041 = vdwg.mxu0
        %1042 = vmatprep.subr.mxu0 0.0
        %1043 = vmatpush1.msra.mxu0 0.0
        %1044 = vmatprep.subr.mxu0 0.0
        %1045 = vmatpush1.msra.mxu0 0.0
        %1046 = vmatprep.subr.mxu0 0.0
        %1047 = vmatpush1.msra.mxu0 0.0
        %1048 = vmatprep.subr.mxu0 0.0
        %1049 = vmatpush1.msra.mxu0 0.0
        %1050 = vmatprep.subr.mxu0 0.0
        %1051 = vmatpush1.msra.mxu0 0.0
        %1052 = vmatprep.subr.mxu0 0.0
        %1053 = vmatpush1.msra.mxu0 0.0
        %1054 = vmatprep.subr.mxu0 0.0
        %1055 = vmatpush1.msra.mxu0 0.0
        %1056 = vmatprep.subr.mxu0 0.0
        %1057 = vmatpush1.msra.mxu0 0.0
        %1058 = vmatprep.subr.mxu0 0.0
        %1059 = vmatpush1.msra.mxu0 0.0
        %1060 = vmatprep.subr.mxu0 0.0
        %1061 = vmatpush1.msra.mxu0 0.0
        %1062 = vmatprep.subr.mxu0 0.0
        %1063 = vmatpush1.msra.mxu0 0.0
        %1064 = vmatprep.subr.mxu0 0.0
        %1065 = vmatpush1.msra.mxu0 0.0
        %1066 = vmatprep.subr.mxu0 0.0
        %1067 = vmatpush1.msra.mxu0 0.0
        %1068 = vmatprep.subr.mxu0 0.0
        %1069 = vmatpush1.msra.mxu0 0.0
        %1070 = vmatprep.subr.mxu0 0.0
        %1071 = vmatpush1.msra.mxu0 0.0
        %1072 = vmatprep.subr.mxu0 0.0
        %v1073 = vand.u32 %v740, 4294901760
        %v1074 = vsub.f32 %v740, %v1073
        %v1075 = vand.u32 %v1074, 4294901760
        %1076 = vmatpush1.msra.mxu0 %v1075
        %1077 = vmatprep.subr.mxu0 0.0
        %1078 = vmatpush2.msra.mxu0 0.0
        %1079 = vmatprep.subr.mxu0 0.0
        %1080 = vmatpush2.msra.mxu0 0.0
        %1081 = vmatprep.subr.mxu0 0.0
        %1082 = vmatpush2.msra.mxu0 0.0
        %1083 = vmatprep.subr.mxu0 0.0
        %1084 = vmatpush2.msra.mxu0 0.0
        %1085 = vmatprep.subr.mxu0 0.0
        %1086 = vmatpush2.msra.mxu0 0.0
        %1087 = vmatprep.subr.mxu0 0.0
        %1088 = vmatpush2.msra.mxu0 0.0
        %1089 = vmatprep.subr.mxu0 0.0
        %1090 = vmatpush2.msra.mxu0 0.0
        %1091 = vmatprep.subr.mxu0 0.0
        %1092 = vmatpush2.msra.mxu0 0.0
        %1093 = vmatprep.subr.mxu0 0.0
        %1094 = vmatpush2.msra.mxu0 0.0
        %1095 = vmatprep.subr.mxu0 0.0
        %1096 = vmatpush2.msra.mxu0 0.0
        %1097 = vmatprep.subr.mxu0 0.0
        %1098 = vmatpush2.msra.mxu0 0.0
        %1099 = vmatprep.subr.mxu0 0.0
        %1100 = vmatpush2.msra.mxu0 0.0
        %1101 = vmatprep.subr.mxu0 0.0
        %1102 = vmatpush2.msra.mxu0 0.0
        %1103 = vmatprep.subr.mxu0 0.0
        %1104 = vmatpush2.msra.mxu0 0.0
        %1105 = vmatprep.subr.mxu0 0.0
        %1106 = vmatpush2.msra.mxu0 0.0
        %1107 = vmatprep.subr.mxu0 0.0
        %1108 = vmatpush2.msra.mxu0 0.0
        %1109 = vmatprep.mubr.f32.mxu0 0.0
        %v1110 = vand.u32 %v737, 4294901760
        %1111 = vmatmul.mubr.f32.gmra.mxu0 %v1110
        %v1112 = vpop.f32.mrf.mxu0
        %v1113 = vadd.f32 %v1039, %v1112
        %v1114 = vpop.f32.mrf.mxu0
        %1115 = vdwg.mxu0
        %1116 = vmatprep.subr.mxu0 0.0
        %1117 = vmatpush1.msra.mxu0 0.0
        %1118 = vmatprep.subr.mxu0 0.0
        %1119 = vmatpush1.msra.mxu0 0.0
        %1120 = vmatprep.subr.mxu0 0.0
        %1121 = vmatpush1.msra.mxu0 0.0
        %1122 = vmatprep.subr.mxu0 0.0
        %1123 = vmatpush1.msra.mxu0 0.0
        %1124 = vmatprep.subr.mxu0 0.0
        %1125 = vmatpush1.msra.mxu0 0.0
        %1126 = vmatprep.subr.mxu0 0.0
        %1127 = vmatpush1.msra.mxu0 0.0
        %1128 = vmatprep.subr.mxu0 0.0
        %1129 = vmatpush1.msra.mxu0 0.0
        %1130 = vmatprep.subr.mxu0 0.0
        %1131 = vmatpush1.msra.mxu0 0.0
        %1132 = vmatprep.subr.mxu0 0.0
        %1133 = vmatpush1.msra.mxu0 0.0
        %1134 = vmatprep.subr.mxu0 0.0
        %1135 = vmatpush1.msra.mxu0 0.0
        %1136 = vmatprep.subr.mxu0 0.0
        %1137 = vmatpush1.msra.mxu0 0.0
        %1138 = vmatprep.subr.mxu0 0.0
        %1139 = vmatpush1.msra.mxu0 0.0
        %1140 = vmatprep.subr.mxu0 0.0
        %1141 = vmatpush1.msra.mxu0 0.0
        %1142 = vmatprep.subr.mxu0 0.0
        %1143 = vmatpush1.msra.mxu0 0.0
        %1144 = vmatprep.subr.mxu0 0.0
        %1145 = vmatpush1.msra.mxu0 0.0
        %1146 = vmatprep.subr.mxu0 0.0
        %v1147 = vand.u32 %v740, 4294901760
        %1148 = vmatpush1.msra.mxu0 %v1147
        %1149 = vmatprep.subr.mxu0 0.0
        %1150 = vmatpush2.msra.mxu0 0.0
        %1151 = vmatprep.subr.mxu0 0.0
        %1152 = vmatpush2.msra.mxu0 0.0
        %1153 = vmatprep.subr.mxu0 0.0
        %1154 = vmatpush2.msra.mxu0 0.0
        %1155 = vmatprep.subr.mxu0 0.0
        %1156 = vmatpush2.msra.mxu0 0.0
        %1157 = vmatprep.subr.mxu0 0.0
        %1158 = vmatpush2.msra.mxu0 0.0
        %1159 = vmatprep.subr.mxu0 0.0
        %1160 = vmatpush2.msra.mxu0 0.0
        %1161 = vmatprep.subr.mxu0 0.0
        %1162 = vmatpush2.msra.mxu0 0.0
        %1163 = vmatprep.subr.mxu0 0.0
        %1164 = vmatpush2.msra.mxu0 0.0
        %1165 = vmatprep.subr.mxu0 0.0
        %1166 = vmatpush2.msra.mxu0 0.0
        %1167 = vmatprep.subr.mxu0 0.0
        %1168 = vmatpush2.msra.mxu0 0.0
        %1169 = vmatprep.subr.mxu0 0.0
        %1170 = vmatpush2.msra.mxu0 0.0
        %1171 = vmatprep.subr.mxu0 0.0
        %1172 = vmatpush2.msra.mxu0 0.0
        %1173 = vmatprep.subr.mxu0 0.0
        %1174 = vmatpush2.msra.mxu0 0.0
        %1175 = vmatprep.subr.mxu0 0.0
        %1176 = vmatpush2.msra.mxu0 0.0
        %1177 = vmatprep.subr.mxu0 0.0
        %1178 = vmatpush2.msra.mxu0 0.0
        %1179 = vmatprep.subr.mxu0 0.0
        %1180 = vmatpush2.msra.mxu0 0.0
        %1181 = vmatprep.mubr.f32.mxu0 0.0
        %v1182 = vand.u32 %v737, 4294901760
        %1183 = vmatmul.mubr.f32.gmra.mxu0 %v1182
        %v1184 = vpop.f32.mrf.mxu0
        %v1185 = vadd.f32 %v1113, %v1184
        %v1186 = vpop.f32.mrf.mxu0
        %1187 = vdwg.mxu0
        %s1188 = scalar_lea.vmem %s2, 8
        %v1189 = vld [vmem:[%s1188] sm:$0xf]
        %v1191 = vsel %vm267, %v279, 0
        %v1194 = vsel %vm286, %v1189, 0
        %1196 = vmatprep.subr.mxu0 0.0
        %1197 = vmatpush1.msra.mxu0 0.0
        %1198 = vmatprep.subr.mxu0 0.0
        %1199 = vmatpush1.msra.mxu0 0.0
        %1200 = vmatprep.subr.mxu0 0.0
        %1201 = vmatpush1.msra.mxu0 0.0
        %1202 = vmatprep.subr.mxu0 0.0
        %1203 = vmatpush1.msra.mxu0 0.0
        %1204 = vmatprep.subr.mxu0 0.0
        %1205 = vmatpush1.msra.mxu0 0.0
        %1206 = vmatprep.subr.mxu0 0.0
        %1207 = vmatpush1.msra.mxu0 0.0
        %1208 = vmatprep.subr.mxu0 0.0
        %1209 = vmatpush1.msra.mxu0 0.0
        %1210 = vmatprep.subr.mxu0 0.0
        %1211 = vmatpush1.msra.mxu0 0.0
        %1212 = vmatprep.subr.mxu0 0.0
        %1213 = vmatpush1.msra.mxu0 0.0
        %1214 = vmatprep.subr.mxu0 0.0
        %1215 = vmatpush1.msra.mxu0 0.0
        %1216 = vmatprep.subr.mxu0 0.0
        %1217 = vmatpush1.msra.mxu0 0.0
        %1218 = vmatprep.subr.mxu0 0.0
        %1219 = vmatpush1.msra.mxu0 0.0
        %1220 = vmatprep.subr.mxu0 0.0
        %1221 = vmatpush1.msra.mxu0 0.0
        %1222 = vmatprep.subr.mxu0 0.0
        %1223 = vmatpush1.msra.mxu0 0.0
        %1224 = vmatprep.subr.mxu0 0.0
        %1225 = vmatpush1.msra.mxu0 0.0
        %1226 = vmatprep.subr.mxu0 0.0
        %v1227 = vand.u32 %v1194, 4294901760
        %1228 = vmatpush1.msra.mxu0 %v1227
        %1229 = vmatprep.subr.mxu0 0.0
        %1230 = vmatpush2.msra.mxu0 0.0
        %1231 = vmatprep.subr.mxu0 0.0
        %1232 = vmatpush2.msra.mxu0 0.0
        %1233 = vmatprep.subr.mxu0 0.0
        %1234 = vmatpush2.msra.mxu0 0.0
        %1235 = vmatprep.subr.mxu0 0.0
        %1236 = vmatpush2.msra.mxu0 0.0
        %1237 = vmatprep.subr.mxu0 0.0
        %1238 = vmatpush2.msra.mxu0 0.0
        %1239 = vmatprep.subr.mxu0 0.0
        %1240 = vmatpush2.msra.mxu0 0.0
        %1241 = vmatprep.subr.mxu0 0.0
        %1242 = vmatpush2.msra.mxu0 0.0
        %1243 = vmatprep.subr.mxu0 0.0
        %1244 = vmatpush2.msra.mxu0 0.0
        %1245 = vmatprep.subr.mxu0 0.0
        %1246 = vmatpush2.msra.mxu0 0.0
        %1247 = vmatprep.subr.mxu0 0.0
        %1248 = vmatpush2.msra.mxu0 0.0
        %1249 = vmatprep.subr.mxu0 0.0
        %1250 = vmatpush2.msra.mxu0 0.0
        %1251 = vmatprep.subr.mxu0 0.0
        %1252 = vmatpush2.msra.mxu0 0.0
        %1253 = vmatprep.subr.mxu0 0.0
        %1254 = vmatpush2.msra.mxu0 0.0
        %1255 = vmatprep.subr.mxu0 0.0
        %1256 = vmatpush2.msra.mxu0 0.0
        %1257 = vmatprep.subr.mxu0 0.0
        %1258 = vmatpush2.msra.mxu0 0.0
        %1259 = vmatprep.subr.mxu0 0.0
        %1260 = vmatpush2.msra.mxu0 0.0
        %1261 = vmatprep.mubr.f32.mxu0 0.0
        %v1262 = vand.u32 %v1191, 4294901760
        %v1263 = vsub.f32 %v1191, %v1262
        %v1264 = vand.u32 %v1263, 4294901760
        %v1265 = vsub.f32 %v1263, %v1264
        %v1266 = vand.u32 %v1265, 4294901760
        %1267 = vmatmul.mubr.f32.gmra.mxu0 %v1266
        %v1268 = vpop.f32.mrf.mxu0
        %v1269 = vadd.f32 0.0, %v1268
        %v1270 = vpop.f32.mrf.mxu0
        %1271 = vdwg.mxu0
        %1272 = vmatprep.subr.mxu0 0.0
        %1273 = vmatpush1.msra.mxu0 0.0
        %1274 = vmatprep.subr.mxu0 0.0
        %1275 = vmatpush1.msra.mxu0 0.0
        %1276 = vmatprep.subr.mxu0 0.0
        %1277 = vmatpush1.msra.mxu0 0.0
        %1278 = vmatprep.subr.mxu0 0.0
        %1279 = vmatpush1.msra.mxu0 0.0
        %1280 = vmatprep.subr.mxu0 0.0
        %1281 = vmatpush1.msra.mxu0 0.0
        %1282 = vmatprep.subr.mxu0 0.0
        %1283 = vmatpush1.msra.mxu0 0.0
        %1284 = vmatprep.subr.mxu0 0.0
        %1285 = vmatpush1.msra.mxu0 0.0
        %1286 = vmatprep.subr.mxu0 0.0
        %1287 = vmatpush1.msra.mxu0 0.0
        %1288 = vmatprep.subr.mxu0 0.0
        %1289 = vmatpush1.msra.mxu0 0.0
        %1290 = vmatprep.subr.mxu0 0.0
        %1291 = vmatpush1.msra.mxu0 0.0
        %1292 = vmatprep.subr.mxu0 0.0
        %1293 = vmatpush1.msra.mxu0 0.0
        %1294 = vmatprep.subr.mxu0 0.0
        %1295 = vmatpush1.msra.mxu0 0.0
        %1296 = vmatprep.subr.mxu0 0.0
        %1297 = vmatpush1.msra.mxu0 0.0
        %1298 = vmatprep.subr.mxu0 0.0
        %1299 = vmatpush1.msra.mxu0 0.0
        %1300 = vmatprep.subr.mxu0 0.0
        %1301 = vmatpush1.msra.mxu0 0.0
        %1302 = vmatprep.subr.mxu0 0.0
        %v1303 = vand.u32 %v1194, 4294901760
        %v1304 = vsub.f32 %v1194, %v1303
        %v1305 = vand.u32 %v1304, 4294901760
        %v1306 = vsub.f32 %v1304, %v1305
        %v1307 = vand.u32 %v1306, 4294901760
        %1308 = vmatpush1.msra.mxu0 %v1307
        %1309 = vmatprep.subr.mxu0 0.0
        %1310 = vmatpush2.msra.mxu0 0.0
        %1311 = vmatprep.subr.mxu0 0.0
        %1312 = vmatpush2.msra.mxu0 0.0
        %1313 = vmatprep.subr.mxu0 0.0
        %1314 = vmatpush2.msra.mxu0 0.0
        %1315 = vmatprep.subr.mxu0 0.0
        %1316 = vmatpush2.msra.mxu0 0.0
        %1317 = vmatprep.subr.mxu0 0.0
        %1318 = vmatpush2.msra.mxu0 0.0
        %1319 = vmatprep.subr.mxu0 0.0
        %1320 = vmatpush2.msra.mxu0 0.0
        %1321 = vmatprep.subr.mxu0 0.0
        %1322 = vmatpush2.msra.mxu0 0.0
        %1323 = vmatprep.subr.mxu0 0.0
        %1324 = vmatpush2.msra.mxu0 0.0
        %1325 = vmatprep.subr.mxu0 0.0
        %1326 = vmatpush2.msra.mxu0 0.0
        %1327 = vmatprep.subr.mxu0 0.0
        %1328 = vmatpush2.msra.mxu0 0.0
        %1329 = vmatprep.subr.mxu0 0.0
        %1330 = vmatpush2.msra.mxu0 0.0
        %1331 = vmatprep.subr.mxu0 0.0
        %1332 = vmatpush2.msra.mxu0 0.0
        %1333 = vmatprep.subr.mxu0 0.0
        %1334 = vmatpush2.msra.mxu0 0.0
        %1335 = vmatprep.subr.mxu0 0.0
        %1336 = vmatpush2.msra.mxu0 0.0
        %1337 = vmatprep.subr.mxu0 0.0
        %1338 = vmatpush2.msra.mxu0 0.0
        %1339 = vmatprep.subr.mxu0 0.0
        %1340 = vmatpush2.msra.mxu0 0.0
        %1341 = vmatprep.mubr.f32.mxu0 0.0
        %v1342 = vand.u32 %v1191, 4294901760
        %1343 = vmatmul.mubr.f32.gmra.mxu0 %v1342
        %v1344 = vpop.f32.mrf.mxu0
        %v1345 = vadd.f32 %v1269, %v1344
        %v1346 = vpop.f32.mrf.mxu0
        %1347 = vdwg.mxu0
        %1348 = vmatprep.subr.mxu0 0.0
        %1349 = vmatpush1.msra.mxu0 0.0
        %1350 = vmatprep.subr.mxu0 0.0
        %1351 = vmatpush1.msra.mxu0 0.0
        %1352 = vmatprep.subr.mxu0 0.0
        %1353 = vmatpush1.msra.mxu0 0.0
        %1354 = vmatprep.subr.mxu0 0.0
        %1355 = vmatpush1.msra.mxu0 0.0
        %1356 = vmatprep.subr.mxu0 0.0
        %1357 = vmatpush1.msra.mxu0 0.0
        %1358 = vmatprep.subr.mxu0 0.0
        %1359 = vmatpush1.msra.mxu0 0.0
        %1360 = vmatprep.subr.mxu0 0.0
        %1361 = vmatpush1.msra.mxu0 0.0
        %1362 = vmatprep.subr.mxu0 0.0
        %1363 = vmatpush1.msra.mxu0 0.0
        %1364 = vmatprep.subr.mxu0 0.0
        %1365 = vmatpush1.msra.mxu0 0.0
        %1366 = vmatprep.subr.mxu0 0.0
        %1367 = vmatpush1.msra.mxu0 0.0
        %1368 = vmatprep.subr.mxu0 0.0
        %1369 = vmatpush1.msra.mxu0 0.0
        %1370 = vmatprep.subr.mxu0 0.0
        %1371 = vmatpush1.msra.mxu0 0.0
        %1372 = vmatprep.subr.mxu0 0.0
        %1373 = vmatpush1.msra.mxu0 0.0
        %1374 = vmatprep.subr.mxu0 0.0
        %1375 = vmatpush1.msra.mxu0 0.0
        %1376 = vmatprep.subr.mxu0 0.0
        %1377 = vmatpush1.msra.mxu0 0.0
        %1378 = vmatprep.subr.mxu0 0.0
        %v1379 = vand.u32 %v1194, 4294901760
        %v1380 = vsub.f32 %v1194, %v1379
        %1381 = vmatpush1.msra.mxu0 %v1380
        %1382 = vmatprep.subr.mxu0 0.0
        %1383 = vmatpush2.msra.mxu0 0.0
        %1384 = vmatprep.subr.mxu0 0.0
        %1385 = vmatpush2.msra.mxu0 0.0
        %1386 = vmatprep.subr.mxu0 0.0
        %1387 = vmatpush2.msra.mxu0 0.0
        %1388 = vmatprep.subr.mxu0 0.0
        %1389 = vmatpush2.msra.mxu0 0.0
        %1390 = vmatprep.subr.mxu0 0.0
        %1391 = vmatpush2.msra.mxu0 0.0
        %1392 = vmatprep.subr.mxu0 0.0
        %1393 = vmatpush2.msra.mxu0 0.0
        %1394 = vmatprep.subr.mxu0 0.0
        %1395 = vmatpush2.msra.mxu0 0.0
        %1396 = vmatprep.subr.mxu0 0.0
        %1397 = vmatpush2.msra.mxu0 0.0
        %1398 = vmatprep.subr.mxu0 0.0
        %1399 = vmatpush2.msra.mxu0 0.0
        %1400 = vmatprep.subr.mxu0 0.0
        %1401 = vmatpush2.msra.mxu0 0.0
        %1402 = vmatprep.subr.mxu0 0.0
        %1403 = vmatpush2.msra.mxu0 0.0
        %1404 = vmatprep.subr.mxu0 0.0
        %1405 = vmatpush2.msra.mxu0 0.0
        %1406 = vmatprep.subr.mxu0 0.0
        %1407 = vmatpush2.msra.mxu0 0.0
        %1408 = vmatprep.subr.mxu0 0.0
        %1409 = vmatpush2.msra.mxu0 0.0
        %1410 = vmatprep.subr.mxu0 0.0
        %1411 = vmatpush2.msra.mxu0 0.0
        %1412 = vmatprep.subr.mxu0 0.0
        %1413 = vmatpush2.msra.mxu0 0.0
        %1414 = vmatprep.mubr.f32.mxu0 0.0
        %v1415 = vand.u32 %v1191, 4294901760
        %v1416 = vsub.f32 %v1191, %v1415
        %1417 = vmatmul.mubr.f32.gmra.mxu0 %v1416
        %v1418 = vpop.f32.mrf.mxu0
        %v1419 = vadd.f32 %v1345, %v1418
        %v1420 = vpop.f32.mrf.mxu0
        %1421 = vdwg.mxu0
        %1422 = vmatprep.subr.mxu0 0.0
        %1423 = vmatpush1.msra.mxu0 0.0
        %1424 = vmatprep.subr.mxu0 0.0
        %1425 = vmatpush1.msra.mxu0 0.0
        %1426 = vmatprep.subr.mxu0 0.0
        %1427 = vmatpush1.msra.mxu0 0.0
        %1428 = vmatprep.subr.mxu0 0.0
        %1429 = vmatpush1.msra.mxu0 0.0
        %1430 = vmatprep.subr.mxu0 0.0
        %1431 = vmatpush1.msra.mxu0 0.0
        %1432 = vmatprep.subr.mxu0 0.0
        %1433 = vmatpush1.msra.mxu0 0.0
        %1434 = vmatprep.subr.mxu0 0.0
        %1435 = vmatpush1.msra.mxu0 0.0
        %1436 = vmatprep.subr.mxu0 0.0
        %1437 = vmatpush1.msra.mxu0 0.0
        %1438 = vmatprep.subr.mxu0 0.0
        %1439 = vmatpush1.msra.mxu0 0.0
        %1440 = vmatprep.subr.mxu0 0.0
        %1441 = vmatpush1.msra.mxu0 0.0
        %1442 = vmatprep.subr.mxu0 0.0
        %1443 = vmatpush1.msra.mxu0 0.0
        %1444 = vmatprep.subr.mxu0 0.0
        %1445 = vmatpush1.msra.mxu0 0.0
        %1446 = vmatprep.subr.mxu0 0.0
        %1447 = vmatpush1.msra.mxu0 0.0
        %1448 = vmatprep.subr.mxu0 0.0
        %1449 = vmatpush1.msra.mxu0 0.0
        %1450 = vmatprep.subr.mxu0 0.0
        %1451 = vmatpush1.msra.mxu0 0.0
        %1452 = vmatprep.subr.mxu0 0.0
        %v1453 = vand.u32 %v1194, 4294901760
        %1454 = vmatpush1.msra.mxu0 %v1453
        %1455 = vmatprep.subr.mxu0 0.0
        %1456 = vmatpush2.msra.mxu0 0.0
        %1457 = vmatprep.subr.mxu0 0.0
        %1458 = vmatpush2.msra.mxu0 0.0
        %1459 = vmatprep.subr.mxu0 0.0
        %1460 = vmatpush2.msra.mxu0 0.0
        %1461 = vmatprep.subr.mxu0 0.0
        %1462 = vmatpush2.msra.mxu0 0.0
        %1463 = vmatprep.subr.mxu0 0.0
        %1464 = vmatpush2.msra.mxu0 0.0
        %1465 = vmatprep.subr.mxu0 0.0
        %1466 = vmatpush2.msra.mxu0 0.0
        %1467 = vmatprep.subr.mxu0 0.0
        %1468 = vmatpush2.msra.mxu0 0.0
        %1469 = vmatprep.subr.mxu0 0.0
        %1470 = vmatpush2.msra.mxu0 0.0
        %1471 = vmatprep.subr.mxu0 0.0
        %1472 = vmatpush2.msra.mxu0 0.0
        %1473 = vmatprep.subr.mxu0 0.0
        %1474 = vmatpush2.msra.mxu0 0.0
        %1475 = vmatprep.subr.mxu0 0.0
        %1476 = vmatpush2.msra.mxu0 0.0
        %1477 = vmatprep.subr.mxu0 0.0
        %1478 = vmatpush2.msra.mxu0 0.0
        %1479 = vmatprep.subr.mxu0 0.0
        %1480 = vmatpush2.msra.mxu0 0.0
        %1481 = vmatprep.subr.mxu0 0.0
        %1482 = vmatpush2.msra.mxu0 0.0
        %1483 = vmatprep.subr.mxu0 0.0
        %1484 = vmatpush2.msra.mxu0 0.0
        %1485 = vmatprep.subr.mxu0 0.0
        %1486 = vmatpush2.msra.mxu0 0.0
        %1487 = vmatprep.mubr.f32.mxu0 0.0
        %v1488 = vand.u32 %v1191, 4294901760
        %v1489 = vsub.f32 %v1191, %v1488
        %v1490 = vand.u32 %v1489, 4294901760
        %1491 = vmatmul.mubr.f32.gmra.mxu0 %v1490
        %v1492 = vpop.f32.mrf.mxu0
        %v1493 = vadd.f32 %v1419, %v1492
        %v1494 = vpop.f32.mrf.mxu0
        %1495 = vdwg.mxu0
        %1496 = vmatprep.subr.mxu0 0.0
        %1497 = vmatpush1.msra.mxu0 0.0
        %1498 = vmatprep.subr.mxu0 0.0
        %1499 = vmatpush1.msra.mxu0 0.0
        %1500 = vmatprep.subr.mxu0 0.0
        %1501 = vmatpush1.msra.mxu0 0.0
        %1502 = vmatprep.subr.mxu0 0.0
        %1503 = vmatpush1.msra.mxu0 0.0
        %1504 = vmatprep.subr.mxu0 0.0
        %1505 = vmatpush1.msra.mxu0 0.0
        %1506 = vmatprep.subr.mxu0 0.0
        %1507 = vmatpush1.msra.mxu0 0.0
        %1508 = vmatprep.subr.mxu0 0.0
        %1509 = vmatpush1.msra.mxu0 0.0
        %1510 = vmatprep.subr.mxu0 0.0
        %1511 = vmatpush1.msra.mxu0 0.0
        %1512 = vmatprep.subr.mxu0 0.0
        %1513 = vmatpush1.msra.mxu0 0.0
        %1514 = vmatprep.subr.mxu0 0.0
        %1515 = vmatpush1.msra.mxu0 0.0
        %1516 = vmatprep.subr.mxu0 0.0
        %1517 = vmatpush1.msra.mxu0 0.0
        %1518 = vmatprep.subr.mxu0 0.0
        %1519 = vmatpush1.msra.mxu0 0.0
        %1520 = vmatprep.subr.mxu0 0.0
        %1521 = vmatpush1.msra.mxu0 0.0
        %1522 = vmatprep.subr.mxu0 0.0
        %1523 = vmatpush1.msra.mxu0 0.0
        %1524 = vmatprep.subr.mxu0 0.0
        %1525 = vmatpush1.msra.mxu0 0.0
        %1526 = vmatprep.subr.mxu0 0.0
        %v1527 = vand.u32 %v1194, 4294901760
        %v1528 = vsub.f32 %v1194, %v1527
        %v1529 = vand.u32 %v1528, 4294901760
        %1530 = vmatpush1.msra.mxu0 %v1529
        %1531 = vmatprep.subr.mxu0 0.0
        %1532 = vmatpush2.msra.mxu0 0.0
        %1533 = vmatprep.subr.mxu0 0.0
        %1534 = vmatpush2.msra.mxu0 0.0
        %1535 = vmatprep.subr.mxu0 0.0
        %1536 = vmatpush2.msra.mxu0 0.0
        %1537 = vmatprep.subr.mxu0 0.0
        %1538 = vmatpush2.msra.mxu0 0.0
        %1539 = vmatprep.subr.mxu0 0.0
        %1540 = vmatpush2.msra.mxu0 0.0
        %1541 = vmatprep.subr.mxu0 0.0
        %1542 = vmatpush2.msra.mxu0 0.0
        %1543 = vmatprep.subr.mxu0 0.0
        %1544 = vmatpush2.msra.mxu0 0.0
        %1545 = vmatprep.subr.mxu0 0.0
        %1546 = vmatpush2.msra.mxu0 0.0
        %1547 = vmatprep.subr.mxu0 0.0
        %1548 = vmatpush2.msra.mxu0 0.0
        %1549 = vmatprep.subr.mxu0 0.0
        %1550 = vmatpush2.msra.mxu0 0.0
        %1551 = vmatprep.subr.mxu0 0.0
        %1552 = vmatpush2.msra.mxu0 0.0
        %1553 = vmatprep.subr.mxu0 0.0
        %1554 = vmatpush2.msra.mxu0 0.0
        %1555 = vmatprep.subr.mxu0 0.0
        %1556 = vmatpush2.msra.mxu0 0.0
        %1557 = vmatprep.subr.mxu0 0.0
        %1558 = vmatpush2.msra.mxu0 0.0
        %1559 = vmatprep.subr.mxu0 0.0
        %1560 = vmatpush2.msra.mxu0 0.0
        %1561 = vmatprep.subr.mxu0 0.0
        %1562 = vmatpush2.msra.mxu0 0.0
        %1563 = vmatprep.mubr.f32.mxu0 0.0
        %v1564 = vand.u32 %v1191, 4294901760
        %1565 = vmatmul.mubr.f32.gmra.mxu0 %v1564
        %v1566 = vpop.f32.mrf.mxu0
        %v1567 = vadd.f32 %v1493, %v1566
        %v1568 = vpop.f32.mrf.mxu0
        %1569 = vdwg.mxu0
        %1570 = vmatprep.subr.mxu0 0.0
        %1571 = vmatpush1.msra.mxu0 0.0
        %1572 = vmatprep.subr.mxu0 0.0
        %1573 = vmatpush1.msra.mxu0 0.0
        %1574 = vmatprep.subr.mxu0 0.0
        %1575 = vmatpush1.msra.mxu0 0.0
        %1576 = vmatprep.subr.mxu0 0.0
        %1577 = vmatpush1.msra.mxu0 0.0
        %1578 = vmatprep.subr.mxu0 0.0
        %1579 = vmatpush1.msra.mxu0 0.0
        %1580 = vmatprep.subr.mxu0 0.0
        %1581 = vmatpush1.msra.mxu0 0.0
        %1582 = vmatprep.subr.mxu0 0.0
        %1583 = vmatpush1.msra.mxu0 0.0
        %1584 = vmatprep.subr.mxu0 0.0
        %1585 = vmatpush1.msra.mxu0 0.0
        %1586 = vmatprep.subr.mxu0 0.0
        %1587 = vmatpush1.msra.mxu0 0.0
        %1588 = vmatprep.subr.mxu0 0.0
        %1589 = vmatpush1.msra.mxu0 0.0
        %1590 = vmatprep.subr.mxu0 0.0
        %1591 = vmatpush1.msra.mxu0 0.0
        %1592 = vmatprep.subr.mxu0 0.0
        %1593 = vmatpush1.msra.mxu0 0.0
        %1594 = vmatprep.subr.mxu0 0.0
        %1595 = vmatpush1.msra.mxu0 0.0
        %1596 = vmatprep.subr.mxu0 0.0
        %1597 = vmatpush1.msra.mxu0 0.0
        %1598 = vmatprep.subr.mxu0 0.0
        %1599 = vmatpush1.msra.mxu0 0.0
        %1600 = vmatprep.subr.mxu0 0.0
        %v1601 = vand.u32 %v1194, 4294901760
        %1602 = vmatpush1.msra.mxu0 %v1601
        %1603 = vmatprep.subr.mxu0 0.0
        %1604 = vmatpush2.msra.mxu0 0.0
        %1605 = vmatprep.subr.mxu0 0.0
        %1606 = vmatpush2.msra.mxu0 0.0
        %1607 = vmatprep.subr.mxu0 0.0
        %1608 = vmatpush2.msra.mxu0 0.0
        %1609 = vmatprep.subr.mxu0 0.0
        %1610 = vmatpush2.msra.mxu0 0.0
        %1611 = vmatprep.subr.mxu0 0.0
        %1612 = vmatpush2.msra.mxu0 0.0
        %1613 = vmatprep.subr.mxu0 0.0
        %1614 = vmatpush2.msra.mxu0 0.0
        %1615 = vmatprep.subr.mxu0 0.0
        %1616 = vmatpush2.msra.mxu0 0.0
        %1617 = vmatprep.subr.mxu0 0.0
        %1618 = vmatpush2.msra.mxu0 0.0
        %1619 = vmatprep.subr.mxu0 0.0
        %1620 = vmatpush2.msra.mxu0 0.0
        %1621 = vmatprep.subr.mxu0 0.0
        %1622 = vmatpush2.msra.mxu0 0.0
        %1623 = vmatprep.subr.mxu0 0.0
        %1624 = vmatpush2.msra.mxu0 0.0
        %1625 = vmatprep.subr.mxu0 0.0
        %1626 = vmatpush2.msra.mxu0 0.0
        %1627 = vmatprep.subr.mxu0 0.0
        %1628 = vmatpush2.msra.mxu0 0.0
        %1629 = vmatprep.subr.mxu0 0.0
        %1630 = vmatpush2.msra.mxu0 0.0
        %1631 = vmatprep.subr.mxu0 0.0
        %1632 = vmatpush2.msra.mxu0 0.0
        %1633 = vmatprep.subr.mxu0 0.0
        %1634 = vmatpush2.msra.mxu0 0.0
        %1635 = vmatprep.mubr.f32.mxu0 0.0
        %v1636 = vand.u32 %v1191, 4294901760
        %1637 = vmatmul.mubr.f32.gmra.mxu0 %v1636
        %v1638 = vpop.f32.mrf.mxu0
        %v1639 = vadd.f32 %v1567, %v1638
        %v1640 = vpop.f32.mrf.mxu0
        %1641 = vdwg.mxu0
        %v1642 = vadd.f32 %v1185, %v1639
        %v1643 = vld [vmem:[%s262] sm:$0xff]
        %v1644 = vadd.f32 %v1643, %v1642
        %vm1645 = vcmask 261120
        %1646 = vst.msk [vmem:[%s244] sm:$0xff] %vm1645, %v1644
        %s1647 = sand.u32 %s143, 1
        %s1648 = scalar_lea.sflag [#allocation4], %s1647
        %s1649 = sand.u32 %s143, 1
        %s1650 = smul.addr %s1649, 8
        %s1651 = scalar_lea.vmem [#allocation3], %s1650
        // Predicated region
        $region37: #{tpu_custom_call.1} parent=35 // pred_check
          %p1652 = pneg %p153
        $region38: #{tpu_custom_call.1} parent=35 // pred_check_branch
          %1654 = sbr.rel (%p1652) target = $region40
        $region39: #{tpu_custom_call.1} parent=35 // pred_region
          %s1656 = ssub.s32 128, 128
          %1657 = vsyncadd %s1648, %s1656
          %s1658 = sadd.s32 %s22, %s23
          %s1659 = smul.addr %s1658, 128
          %s1660 = scalar_lea.hbm %s4, %s1659
          %s1662 = sshll.u32 %s1651, 4
          %s1663 = int_to_ptr.vmem [resolvable:$true] %s1662
          %1665 = dma.vmem_to_hbm [thread:$0]  %s1663, 128, %s1660, %s1648
        $region40: #{tpu_custom_call.1} parent=35 // pred_fallthru
          _
      $region36: #{tpu_custom_call.1} parent=5 // pred_fallthru
        _
      %p1666 = scmp.le.s32.totalorder 2, %s13
      // Predicated region
      $region41: #{tpu_custom_call.1} parent=5 // pred_check
        %p1667 = pneg %p1666
      $region42: #{tpu_custom_call.1} parent=5 // pred_check_branch
        %1669 = sbr.rel (%p1667) target = $region44
      $region43: #{tpu_custom_call.1} parent=5 // pred_region
        %s1670 = ssub.s32 %s13, 2
        // Predicated region
        $region45: #{tpu_custom_call.1} parent=43 // pred_check
          %p1671 = pneg %p159
        $region46: #{tpu_custom_call.1} parent=43 // pred_check_branch
          %1673 = sbr.rel (%p1671) target = $region48
        $region47: #{tpu_custom_call.1} parent=43 // pred_region
          %s1674 = sand.u32 %s144, 1
          %s1675 = scalar_lea.sflag [#allocation4], %s1674
          %s1676 = sand.u32 %s144, 1
          %s1677 = smul.addr %s1676, 8
          %s1678 = scalar_lea.vmem [#allocation3], %s1677
          %1679 = dma.done %s1675, 128
        $region48: #{tpu_custom_call.1} parent=43 // pred_fallthru
          _
      $region44: #{tpu_custom_call.1} parent=5 // pred_fallthru
        _
    $region6: #{tpu_custom_call.1} parent=1 // loop_footer
      %s17 = sadd.s32 1, %s13
    $region7: #{tpu_custom_call.1} parent=1 // loop_footer_branch
      %12 = sbr.rel target = $region3
    $region8: #{tpu_custom_call.1} parent=1 // loop_exit
      _
    %1680 = vsyncpa [#allocation4], 1
    %s1681 = scalar_lea.sflag [#allocation4], 1
    %1682 = vsyncpa %s1681, 1

</llo_original>
